<compile_context>
chip_gen: v7x
topology: tpu7x:2x2x1
jax: 0.10.0
libtpu: 0.0.40
codegen_flags: <defaults>
</compile_context>

<pallas_src>
import jax
import jax.numpy as jnp
import numpy as np
from jax.experimental import pallas as pl
from jax.experimental.pallas import tpu as pltpu


def _generator_kernel(x_ref, wih_t_ref, whh_t_ref, b_ref,
                      wlin_t_ref, blin_ref, h0_ref, c0_ref,
                      o_ref, hn_ref, cn_ref,
                      h1_scratch):
    """LSTM (1 layer, batch_first=False semantics) + fused Linear head.

    x_ref      : (T*B, I)   f32   time-major input flattened to 2-D
    wih_t_ref  : (I, 4H)    f32   transposed weight_ih_l0
    whh_t_ref  : (H, 4H)    f32   transposed weight_hh_l0
    b_ref      : (1, 4H)    f32   bias_ih + bias_hh (fused)
    wlin_t_ref : (B*H, B*O) f32   transposed linear weight
    blin_ref   : (1, B*O)   f32
    h0_ref/c0_ref : (B, H)  f32   initial LSTM state
    o_ref      : (T, B*O)   f32   linear output (flattened)
    hn_ref/cn_ref : (B, H)  f32   final LSTM state
    h1_scratch : (T*B, H)   f32   per-step hidden states (contiguous row blocks)
    """
    TB = x_ref.shape[0]
    B, H = h0_ref.shape
    T = TB // B
    BO = o_ref.shape[1]

    # ---- Prologue: hoist the input projection out of the recurrence. ----
    # One batched (T*B, I) @ (I, 4H) MXU matmul, result kept in vregs
    # (64x128 f32 = 8 vregs) — no VMEM scratch round-trip for gx.
    gx = (jnp.dot(x_ref[...], wih_t_ref[...], preferred_element_type=jnp.float32)
          + b_ref[...])                                    # (T*B, 4H)

    whh_t = whh_t_ref[...]            # (H, 4H), stays resident in vregs
    h = h0_ref[...]                   # (B, H)
    c = c0_ref[...]                   # (B, H)

    # ---- Recurrence, fully unrolled (T is a small compile-time constant). ----
    # PyTorch gate order along the 4H axis: input, forget, cell(g), output.
    for t in range(T):
        gates = (gx[t * B:(t + 1) * B, :]
                 + jnp.dot(h, whh_t, preferred_element_type=jnp.float32))  # (B, 4H)
        # One full-vreg sigmoid pass; i/f/o gates are lane slices of it.
        sg = jax.nn.sigmoid(gates)
        i_g = sg[:, 0 * H:1 * H]
        f_g = sg[:, 1 * H:2 * H]
        o_g = sg[:, 3 * H:4 * H]
        g_g = jnp.tanh(gates[:, 2 * H:3 * H])
        c = f_g * c + i_g * g_g
        h = o_g * jnp.tanh(c)
        # Contiguous, sublane-aligned (B, H) row-block store (off the dep chain).
        h1_scratch[pl.ds(t * B, B), :] = h

    hn_ref[...] = h
    cn_ref[...] = c

    # ---- Epilogue: Linear head without any relayout/reshape. ----
    # o[t] = flatten(h_t) @ Wlin_t + blin
    #      = sum_b h_t[b, :] @ Wlin_t[b*H:(b+1)*H, :] + blin
    # Strided slice pl.ds(b, T, stride=B) gathers h_t[b] for all t as (T, H).
    acc = jnp.zeros((T, BO), jnp.float32)
    for b in range(B):
        hb = h1_scratch[pl.ds(b, T, stride=B), :]            # (T, H)
        wb = wlin_t_ref[pl.ds(b * H, H), :]                  # (H, B*O)
        acc = acc + jnp.dot(hb, wb, preferred_element_type=jnp.float32)
    o_ref[...] = acc + blin_ref[...]


def prepare_params(params):
    """One-time parameter prep (transposes / bias fusion), outside the hot path.

    NOTE: not jittable on purpose — it uses python-int shape arithmetic.
    """
    H = params["whh"].shape[1]
    O = int(params["output_size"])
    B = params["wlin"].shape[0] // O          # wlin: (O*B, H*B)
    return {
        "wih_t": jnp.transpose(params["wih"]).astype(jnp.float32),     # (I, 4H)
        "whh_t": jnp.transpose(params["whh"]).astype(jnp.float32),     # (H, 4H)
        "b": (params["bih"] + params["bhh"]).reshape(1, 4 * H).astype(jnp.float32),
        "wlin_t": jnp.transpose(params["wlin"]).astype(jnp.float32),   # (B*H, B*O)
        "blin": params["blin"].reshape(1, B * O).astype(jnp.float32),
    }


def generator_forward(x, prep, prev_state=None):
    """Pallas version of Generator.forward.

    x : (N, seq_len, input_size) float32, `prep` from prepare_params().
    returns (o, (h_n, c_n)) with
      o   : (N, seq_len, output_size)
      h_n : (num_layers=1, seq_len, hidden_size)
      c_n : (num_layers=1, seq_len, hidden_size)
    """
    # TODO(synk): only num_layers=1 is implemented (matches the module default);
    # dropout_prob is unused in the torch forward() and therefore omitted.
    T, B, I = x.shape
    wih_t, whh_t, b = prep["wih_t"], prep["whh_t"], prep["b"]
    wlin_t, blin = prep["wlin_t"], prep["blin"]
    H = whh_t.shape[0]
    O = blin.shape[1] // B

    if prev_state is None:
        h0 = jnp.zeros((B, H), jnp.float32)
        c0 = jnp.zeros((B, H), jnp.float32)
    else:
        h0 = prev_state[0].reshape(B, H).astype(jnp.float32)
        c0 = prev_state[1].reshape(B, H).astype(jnp.float32)

    x2d = x.reshape(T * B, I).astype(jnp.float32)   # contiguous reshape (free)

    vmem = pl.BlockSpec(memory_space=pltpu.MemorySpace.VMEM)

    flops = 2 * (T * B * I * 4 * H            # input projection
                 + T * B * H * 4 * H          # recurrent matmuls
                 + T * B * H * B * O)         # linear head
    transcendentals = T * B * 6 * H           # sigmoid(4H) + 2 * tanh(H) per step
    bytes_accessed = 4 * (T * B * I + I * 4 * H + H * 4 * H + 4 * H
                          + B * H * B * O + B * O + 4 * B * H + T * B * O)

    o_flat, hn, cn = pl.pallas_call(
        _generator_kernel,
        out_shape=(
            jax.ShapeDtypeStruct((T, B * O), jnp.float32),
            jax.ShapeDtypeStruct((B, H), jnp.float32),
            jax.ShapeDtypeStruct((B, H), jnp.float32),
        ),
        in_specs=[vmem] * 8,
        out_specs=(vmem, vmem, vmem),
        scratch_shapes=[
            pltpu.VMEM((T * B, H), jnp.float32),       # per-step hidden states
        ],
        cost_estimate=pl.CostEstimate(
            flops=flops, transcendentals=transcendentals,
            bytes_accessed=bytes_accessed),
    )(x2d, wih_t, whh_t, b, wlin_t, blin, h0, c0)

    o = o_flat.reshape(T, B, O)
    return o, (hn[None], cn[None])


def _reference_forward(x, params):
    """Pure-JAX reference mirroring torch semantics (for validation)."""
    T, B, I = x.shape
    wih, whh, bih, bhh, wlin, blin, O = (
        params["wih"], params["whh"], params["bih"], params["bhh"],
        params["wlin"], params["blin"], params["output_size"])
    H = whh.shape[1]
    h = jnp.zeros((B, H), jnp.float32)
    c = jnp.zeros((B, H), jnp.float32)
    hs = []
    for t in range(T):
        gates = x[t] @ wih.T + bih + h @ whh.T + bhh
        i = jax.nn.sigmoid(gates[:, :H])
        f = jax.nn.sigmoid(gates[:, H:2 * H])
        g = jnp.tanh(gates[:, 2 * H:3 * H])
        og = jax.nn.sigmoid(gates[:, 3 * H:])
        c = f * c + i * g
        h = og * jnp.tanh(c)
        hs.append(h)
    h1 = jnp.stack(hs, axis=0)                    # (T, B, H)
    o = h1.reshape(T, -1) @ wlin.T + blin
    return o.reshape(T, B, O), h, c


def init_params(key, seq_len, input_size, hidden_size, output_size):
    """Deterministic parameter init (PyTorch-style uniform(-1/sqrt(H), 1/sqrt(H)))."""
    H, I, B, O = hidden_size, input_size, seq_len, output_size
    ks = jax.random.split(key, 6)
    s = 1.0 / np.sqrt(H)
    sl = 1.0 / np.sqrt(H * B)
    return {
        "wih": jax.random.uniform(ks[0], (4 * H, I), jnp.float32, -s, s),
        "whh": jax.random.uniform(ks[1], (4 * H, H), jnp.float32, -s, s),
        "bih": jax.random.uniform(ks[2], (4 * H,), jnp.float32, -s, s),
        "bhh": jax.random.uniform(ks[3], (4 * H,), jnp.float32, -s, s),
        "wlin": jax.random.uniform(ks[4], (O * B, H * B), jnp.float32, -sl, sl),
        "blin": jax.random.uniform(ks[5], (O * B,), jnp.float32, -sl, sl),
        "output_size": O,
    }


if __name__ == "__main__":
    # Small shapes consistent with the module:
    #   N (batch, = LSTM time axis) = 8, seq_len = 8, input_size = 16,
    #   hidden_size = 32, output_size = 4.
    N, SEQ_LEN, INPUT_SIZE, HIDDEN_SIZE, OUTPUT_SIZE = 8, 8, 16, 32, 4

    key = jax.random.PRNGKey(0)
    kx, kp = jax.random.split(key)
    x = jax.random.normal(kx, (N, SEQ_LEN, INPUT_SIZE), jnp.float32)
    params = init_params(kp, SEQ_LEN, INPUT_SIZE, HIDDEN_SIZE, OUTPUT_SIZE)

    # Parameter prep (transposes / bias fusion) done once, eagerly (NOT jitted —
    # it uses python-int shape arithmetic).
    prep = prepare_params(params)
    prep = jax.tree_util.tree_map(jax.block_until_ready, prep)

    fwd = jax.jit(generator_forward)
    o, (hn, cn) = fwd(x, prep)
    o = jax.block_until_ready(o)
    hn = jax.block_until_ready(hn)
    cn = jax.block_until_ready(cn)

    o_ref, h_ref, c_ref = _reference_forward(x, params)
    assert o.shape == (N, SEQ_LEN, OUTPUT_SIZE)
    assert hn.shape == (1, SEQ_LEN, HIDDEN_SIZE)
    assert cn.shape == (1, SEQ_LEN, HIDDEN_SIZE)
    np.testing.assert_allclose(np.asarray(o), np.asarray(o_ref), atol=1e-4, rtol=1e-4)
    np.testing.assert_allclose(np.asarray(hn[0]), np.asarray(h_ref), atol=1e-4, rtol=1e-4)
    np.testing.assert_allclose(np.asarray(cn[0]), np.asarray(c_ref), atol=1e-4, rtol=1e-4)

    print("KERNEL_OK")
</pallas_src>

<mosaic_0001>
module attributes {stable_mosaic.version = 11 : i64} {
  func.func @_generator_kernel(%arg0: memref<64x16xf32, #tpu.memory_space<vmem>>, %arg1: memref<16x128xf32, #tpu.memory_space<vmem>>, %arg2: memref<32x128xf32, #tpu.memory_space<vmem>>, %arg3: memref<1x128xf32, #tpu.memory_space<vmem>>, %arg4: memref<256x32xf32, #tpu.memory_space<vmem>>, %arg5: memref<1x32xf32, #tpu.memory_space<vmem>>, %arg6: memref<8x32xf32, #tpu.memory_space<vmem>>, %arg7: memref<8x32xf32, #tpu.memory_space<vmem>>, %arg8: memref<8x32xf32, #tpu.memory_space<vmem>>, %arg9: memref<8x32xf32, #tpu.memory_space<vmem>>, %arg10: memref<8x32xf32, #tpu.memory_space<vmem>>, %arg11: memref<64x32xf32, #tpu.memory_space<vmem>>) attributes {dimension_semantics = [], scalar_prefetch = 0 : i64, scratch_operands = 1 : i64, tpu.core_type = #tpu.core_type<tc>} {
    %c0 = arith.constant 0 : index
    %c0_0 = arith.constant 0 : index
    %0 = vector.load %arg0[%c0, %c0_0] : memref<64x16xf32, #tpu.memory_space<vmem>>, vector<64x16xf32>
    %c0_1 = arith.constant 0 : index
    %c0_2 = arith.constant 0 : index
    %1 = vector.load %arg1[%c0_1, %c0_2] : memref<16x128xf32, #tpu.memory_space<vmem>>, vector<16x128xf32>
    %cst = arith.constant dense<0.000000e+00> : vector<64x128xf32>
    %2 = tpu.matmul %0, %1, %cst {dimension_numbers = #tpu.dot_dimension_numbers<[1], [0], [0], [1], [0, 0, 1, 1], [], []>} : vector<64x16xf32>, vector<16x128xf32>, vector<64x128xf32> -> vector<64x128xf32>
    %c0_3 = arith.constant 0 : index
    %c0_4 = arith.constant 0 : index
    %3 = vector.load %arg3[%c0_3, %c0_4] : memref<1x128xf32, #tpu.memory_space<vmem>>, vector<1x128xf32>
    %4 = vector.broadcast %3 : vector<1x128xf32> to vector<64x128xf32>
    %5 = arith.addf %2, %4 : vector<64x128xf32>
    %c0_5 = arith.constant 0 : index
    %c0_6 = arith.constant 0 : index
    %6 = vector.load %arg2[%c0_5, %c0_6] : memref<32x128xf32, #tpu.memory_space<vmem>>, vector<32x128xf32>
    %c0_7 = arith.constant 0 : index
    %c0_8 = arith.constant 0 : index
    %7 = vector.load %arg6[%c0_7, %c0_8] : memref<8x32xf32, #tpu.memory_space<vmem>>, vector<8x32xf32>
    %c0_9 = arith.constant 0 : index
    %c0_10 = arith.constant 0 : index
    %8 = vector.load %arg7[%c0_9, %c0_10] : memref<8x32xf32, #tpu.memory_space<vmem>>, vector<8x32xf32>
    %9 = vector.extract_strided_slice %5 {offsets = [0, 0], sizes = [8, 128], strides = [1, 1]} : vector<64x128xf32> to vector<8x128xf32>
    %cst_11 = arith.constant dense<0.000000e+00> : vector<8x128xf32>
    %10 = tpu.matmul %7, %6, %cst_11 {dimension_numbers = #tpu.dot_dimension_numbers<[1], [0], [0], [1], [0, 0, 1, 1], [], []>} : vector<8x32xf32>, vector<32x128xf32>, vector<8x128xf32> -> vector<8x128xf32>
    %11 = arith.addf %9, %10 : vector<8x128xf32>
    %12 = arith.negf %11 : vector<8x128xf32>
    %13 = math.exp %12 : vector<8x128xf32>
    %cst_12 = arith.constant 1.000000e+00 : f32
    %14 = vector.broadcast %cst_12 : f32 to vector<8x128xf32>
    %15 = arith.addf %14, %13 : vector<8x128xf32>
    %16 = arith.divf %14, %15 : vector<8x128xf32>
    %17 = vector.extract_strided_slice %16 {offsets = [0, 0], sizes = [8, 32], strides = [1, 1]} : vector<8x128xf32> to vector<8x32xf32>
    %18 = vector.extract_strided_slice %16 {offsets = [0, 32], sizes = [8, 32], strides = [1, 1]} : vector<8x128xf32> to vector<8x32xf32>
    %19 = vector.extract_strided_slice %16 {offsets = [0, 96], sizes = [8, 32], strides = [1, 1]} : vector<8x128xf32> to vector<8x32xf32>
    %20 = vector.extract_strided_slice %11 {offsets = [0, 64], sizes = [8, 32], strides = [1, 1]} : vector<8x128xf32> to vector<8x32xf32>
    %21 = math.tanh %20 : vector<8x32xf32>
    %22 = arith.mulf %18, %8 : vector<8x32xf32>
    %23 = arith.mulf %17, %21 : vector<8x32xf32>
    %24 = arith.addf %22, %23 : vector<8x32xf32>
    %25 = math.tanh %24 : vector<8x32xf32>
    %26 = arith.mulf %19, %25 : vector<8x32xf32>
    %c0_13 = arith.constant 0 : index
    %c0_14 = arith.constant 0 : index
    %27 = vector.load %arg11[%c0_13, %c0_14] : memref<64x32xf32, #tpu.memory_space<vmem>>, vector<8x32xf32>
    tpu.vector_store %arg11[%c0_13, %c0_14], %26 {strides = array<i32>} : memref<64x32xf32, #tpu.memory_space<vmem>>, vector<8x32xf32>,
    %28 = vector.extract_strided_slice %5 {offsets = [8, 0], sizes = [8, 128], strides = [1, 1]} : vector<64x128xf32> to vector<8x128xf32>
    %cst_15 = arith.constant dense<0.000000e+00> : vector<8x128xf32>
    %29 = tpu.matmul %26, %6, %cst_15 {dimension_numbers = #tpu.dot_dimension_numbers<[1], [0], [0], [1], [0, 0, 1, 1], [], []>} : vector<8x32xf32>, vector<32x128xf32>, vector<8x128xf32> -> vector<8x128xf32>
    %30 = arith.addf %28, %29 : vector<8x128xf32>
    %31 = arith.negf %30 : vector<8x128xf32>
    %32 = math.exp %31 : vector<8x128xf32>
    %cst_16 = arith.constant 1.000000e+00 : f32
    %33 = vector.broadcast %cst_16 : f32 to vector<8x128xf32>
    %34 = arith.addf %33, %32 : vector<8x128xf32>
    %35 = arith.divf %33, %34 : vector<8x128xf32>
    %36 = vector.extract_strided_slice %35 {offsets = [0, 0], sizes = [8, 32], strides = [1, 1]} : vector<8x128xf32> to vector<8x32xf32>
    %37 = vector.extract_strided_slice %35 {offsets = [0, 32], sizes = [8, 32], strides = [1, 1]} : vector<8x128xf32> to vector<8x32xf32>
    %38 = vector.extract_strided_slice %35 {offsets = [0, 96], sizes = [8, 32], strides = [1, 1]} : vector<8x128xf32> to vector<8x32xf32>
    %39 = vector.extract_strided_slice %30 {offsets = [0, 64], sizes = [8, 32], strides = [1, 1]} : vector<8x128xf32> to vector<8x32xf32>
    %40 = math.tanh %39 : vector<8x32xf32>
    %41 = arith.mulf %37, %24 : vector<8x32xf32>
    %42 = arith.mulf %36, %40 : vector<8x32xf32>
    %43 = arith.addf %41, %42 : vector<8x32xf32>
    %44 = math.tanh %43 : vector<8x32xf32>
    %45 = arith.mulf %38, %44 : vector<8x32xf32>
    %c8 = arith.constant 8 : index
    %c0_17 = arith.constant 0 : index
    %46 = vector.load %arg11[%c8, %c0_17] : memref<64x32xf32, #tpu.memory_space<vmem>>, vector<8x32xf32>
    tpu.vector_store %arg11[%c8, %c0_17], %45 {strides = array<i32>} : memref<64x32xf32, #tpu.memory_space<vmem>>, vector<8x32xf32>,
    %47 = vector.extract_strided_slice %5 {offsets = [16, 0], sizes = [8, 128], strides = [1, 1]} : vector<64x128xf32> to vector<8x128xf32>
    %cst_18 = arith.constant dense<0.000000e+00> : vector<8x128xf32>
    %48 = tpu.matmul %45, %6, %cst_18 {dimension_numbers = #tpu.dot_dimension_numbers<[1], [0], [0], [1], [0, 0, 1, 1], [], []>} : vector<8x32xf32>, vector<32x128xf32>, vector<8x128xf32> -> vector<8x128xf32>
    %49 = arith.addf %47, %48 : vector<8x128xf32>
    %50 = arith.negf %49 : vector<8x128xf32>
    %51 = math.exp %50 : vector<8x128xf32>
    %cst_19 = arith.constant 1.000000e+00 : f32
    %52 = vector.broadcast %cst_19 : f32 to vector<8x128xf32>
    %53 = arith.addf %52, %51 : vector<8x128xf32>
    %54 = arith.divf %52, %53 : vector<8x128xf32>
    %55 = vector.extract_strided_slice %54 {offsets = [0, 0], sizes = [8, 32], strides = [1, 1]} : vector<8x128xf32> to vector<8x32xf32>
    %56 = vector.extract_strided_slice %54 {offsets = [0, 32], sizes = [8, 32], strides = [1, 1]} : vector<8x128xf32> to vector<8x32xf32>
    %57 = vector.extract_strided_slice %54 {offsets = [0, 96], sizes = [8, 32], strides = [1, 1]} : vector<8x128xf32> to vector<8x32xf32>
    %58 = vector.extract_strided_slice %49 {offsets = [0, 64], sizes = [8, 32], strides = [1, 1]} : vector<8x128xf32> to vector<8x32xf32>
    %59 = math.tanh %58 : vector<8x32xf32>
    %60 = arith.mulf %56, %43 : vector<8x32xf32>
    %61 = arith.mulf %55, %59 : vector<8x32xf32>
    %62 = arith.addf %60, %61 : vector<8x32xf32>
    %63 = math.tanh %62 : vector<8x32xf32>
    %64 = arith.mulf %57, %63 : vector<8x32xf32>
    %c16 = arith.constant 16 : index
    %c0_20 = arith.constant 0 : index
    %65 = vector.load %arg11[%c16, %c0_20] : memref<64x32xf32, #tpu.memory_space<vmem>>, vector<8x32xf32>
    tpu.vector_store %arg11[%c16, %c0_20], %64 {strides = array<i32>} : memref<64x32xf32, #tpu.memory_space<vmem>>, vector<8x32xf32>,
    %66 = vector.extract_strided_slice %5 {offsets = [24, 0], sizes = [8, 128], strides = [1, 1]} : vector<64x128xf32> to vector<8x128xf32>
    %cst_21 = arith.constant dense<0.000000e+00> : vector<8x128xf32>
    %67 = tpu.matmul %64, %6, %cst_21 {dimension_numbers = #tpu.dot_dimension_numbers<[1], [0], [0], [1], [0, 0, 1, 1], [], []>} : vector<8x32xf32>, vector<32x128xf32>, vector<8x128xf32> -> vector<8x128xf32>
    %68 = arith.addf %66, %67 : vector<8x128xf32>
    %69 = arith.negf %68 : vector<8x128xf32>
    %70 = math.exp %69 : vector<8x128xf32>
    %cst_22 = arith.constant 1.000000e+00 : f32
    %71 = vector.broadcast %cst_22 : f32 to vector<8x128xf32>
    %72 = arith.addf %71, %70 : vector<8x128xf32>
    %73 = arith.divf %71, %72 : vector<8x128xf32>
    %74 = vector.extract_strided_slice %73 {offsets = [0, 0], sizes = [8, 32], strides = [1, 1]} : vector<8x128xf32> to vector<8x32xf32>
    %75 = vector.extract_strided_slice %73 {offsets = [0, 32], sizes = [8, 32], strides = [1, 1]} : vector<8x128xf32> to vector<8x32xf32>
    %76 = vector.extract_strided_slice %73 {offsets = [0, 96], sizes = [8, 32], strides = [1, 1]} : vector<8x128xf32> to vector<8x32xf32>
    %77 = vector.extract_strided_slice %68 {offsets = [0, 64], sizes = [8, 32], strides = [1, 1]} : vector<8x128xf32> to vector<8x32xf32>
    %78 = math.tanh %77 : vector<8x32xf32>
    %79 = arith.mulf %75, %62 : vector<8x32xf32>
    %80 = arith.mulf %74, %78 : vector<8x32xf32>
    %81 = arith.addf %79, %80 : vector<8x32xf32>
    %82 = math.tanh %81 : vector<8x32xf32>
    %83 = arith.mulf %76, %82 : vector<8x32xf32>
    %c24 = arith.constant 24 : index
    %c0_23 = arith.constant 0 : index
    %84 = vector.load %arg11[%c24, %c0_23] : memref<64x32xf32, #tpu.memory_space<vmem>>, vector<8x32xf32>
    tpu.vector_store %arg11[%c24, %c0_23], %83 {strides = array<i32>} : memref<64x32xf32, #tpu.memory_space<vmem>>, vector<8x32xf32>,
    %85 = vector.extract_strided_slice %5 {offsets = [32, 0], sizes = [8, 128], strides = [1, 1]} : vector<64x128xf32> to vector<8x128xf32>
    %cst_24 = arith.constant dense<0.000000e+00> : vector<8x128xf32>
    %86 = tpu.matmul %83, %6, %cst_24 {dimension_numbers = #tpu.dot_dimension_numbers<[1], [0], [0], [1], [0, 0, 1, 1], [], []>} : vector<8x32xf32>, vector<32x128xf32>, vector<8x128xf32> -> vector<8x128xf32>
    %87 = arith.addf %85, %86 : vector<8x128xf32>
    %88 = arith.negf %87 : vector<8x128xf32>
    %89 = math.exp %88 : vector<8x128xf32>
    %cst_25 = arith.constant 1.000000e+00 : f32
    %90 = vector.broadcast %cst_25 : f32 to vector<8x128xf32>
    %91 = arith.addf %90, %89 : vector<8x128xf32>
    %92 = arith.divf %90, %91 : vector<8x128xf32>
    %93 = vector.extract_strided_slice %92 {offsets = [0, 0], sizes = [8, 32], strides = [1, 1]} : vector<8x128xf32> to vector<8x32xf32>
    %94 = vector.extract_strided_slice %92 {offsets = [0, 32], sizes = [8, 32], strides = [1, 1]} : vector<8x128xf32> to vector<8x32xf32>
    %95 = vector.extract_strided_slice %92 {offsets = [0, 96], sizes = [8, 32], strides = [1, 1]} : vector<8x128xf32> to vector<8x32xf32>
    %96 = vector.extract_strided_slice %87 {offsets = [0, 64], sizes = [8, 32], strides = [1, 1]} : vector<8x128xf32> to vector<8x32xf32>
    %97 = math.tanh %96 : vector<8x32xf32>
    %98 = arith.mulf %94, %81 : vector<8x32xf32>
    %99 = arith.mulf %93, %97 : vector<8x32xf32>
    %100 = arith.addf %98, %99 : vector<8x32xf32>
    %101 = math.tanh %100 : vector<8x32xf32>
    %102 = arith.mulf %95, %101 : vector<8x32xf32>
    %c32 = arith.constant 32 : index
    %c0_26 = arith.constant 0 : index
    %103 = vector.load %arg11[%c32, %c0_26] : memref<64x32xf32, #tpu.memory_space<vmem>>, vector<8x32xf32>
    tpu.vector_store %arg11[%c32, %c0_26], %102 {strides = array<i32>} : memref<64x32xf32, #tpu.memory_space<vmem>>, vector<8x32xf32>,
    %104 = vector.extract_strided_slice %5 {offsets = [40, 0], sizes = [8, 128], strides = [1, 1]} : vector<64x128xf32> to vector<8x128xf32>
    %cst_27 = arith.constant dense<0.000000e+00> : vector<8x128xf32>
    %105 = tpu.matmul %102, %6, %cst_27 {dimension_numbers = #tpu.dot_dimension_numbers<[1], [0], [0], [1], [0, 0, 1, 1], [], []>} : vector<8x32xf32>, vector<32x128xf32>, vector<8x128xf32> -> vector<8x128xf32>
    %106 = arith.addf %104, %105 : vector<8x128xf32>
    %107 = arith.negf %106 : vector<8x128xf32>
    %108 = math.exp %107 : vector<8x128xf32>
    %cst_28 = arith.constant 1.000000e+00 : f32
    %109 = vector.broadcast %cst_28 : f32 to vector<8x128xf32>
    %110 = arith.addf %109, %108 : vector<8x128xf32>
    %111 = arith.divf %109, %110 : vector<8x128xf32>
    %112 = vector.extract_strided_slice %111 {offsets = [0, 0], sizes = [8, 32], strides = [1, 1]} : vector<8x128xf32> to vector<8x32xf32>
    %113 = vector.extract_strided_slice %111 {offsets = [0, 32], sizes = [8, 32], strides = [1, 1]} : vector<8x128xf32> to vector<8x32xf32>
    %114 = vector.extract_strided_slice %111 {offsets = [0, 96], sizes = [8, 32], strides = [1, 1]} : vector<8x128xf32> to vector<8x32xf32>
    %115 = vector.extract_strided_slice %106 {offsets = [0, 64], sizes = [8, 32], strides = [1, 1]} : vector<8x128xf32> to vector<8x32xf32>
    %116 = math.tanh %115 : vector<8x32xf32>
    %117 = arith.mulf %113, %100 : vector<8x32xf32>
    %118 = arith.mulf %112, %116 : vector<8x32xf32>
    %119 = arith.addf %117, %118 : vector<8x32xf32>
    %120 = math.tanh %119 : vector<8x32xf32>
    %121 = arith.mulf %114, %120 : vector<8x32xf32>
    %c40 = arith.constant 40 : index
    %c0_29 = arith.constant 0 : index
    %122 = vector.load %arg11[%c40, %c0_29] : memref<64x32xf32, #tpu.memory_space<vmem>>, vector<8x32xf32>
    tpu.vector_store %arg11[%c40, %c0_29], %121 {strides = array<i32>} : memref<64x32xf32, #tpu.memory_space<vmem>>, vector<8x32xf32>,
    %123 = vector.extract_strided_slice %5 {offsets = [48, 0], sizes = [8, 128], strides = [1, 1]} : vector<64x128xf32> to vector<8x128xf32>
    %cst_30 = arith.constant dense<0.000000e+00> : vector<8x128xf32>
    %124 = tpu.matmul %121, %6, %cst_30 {dimension_numbers = #tpu.dot_dimension_numbers<[1], [0], [0], [1], [0, 0, 1, 1], [], []>} : vector<8x32xf32>, vector<32x128xf32>, vector<8x128xf32> -> vector<8x128xf32>
    %125 = arith.addf %123, %124 : vector<8x128xf32>
    %126 = arith.negf %125 : vector<8x128xf32>
    %127 = math.exp %126 : vector<8x128xf32>
    %cst_31 = arith.constant 1.000000e+00 : f32
    %128 = vector.broadcast %cst_31 : f32 to vector<8x128xf32>
    %129 = arith.addf %128, %127 : vector<8x128xf32>
    %130 = arith.divf %128, %129 : vector<8x128xf32>
    %131 = vector.extract_strided_slice %130 {offsets = [0, 0], sizes = [8, 32], strides = [1, 1]} : vector<8x128xf32> to vector<8x32xf32>
    %132 = vector.extract_strided_slice %130 {offsets = [0, 32], sizes = [8, 32], strides = [1, 1]} : vector<8x128xf32> to vector<8x32xf32>
    %133 = vector.extract_strided_slice %130 {offsets = [0, 96], sizes = [8, 32], strides = [1, 1]} : vector<8x128xf32> to vector<8x32xf32>
    %134 = vector.extract_strided_slice %125 {offsets = [0, 64], sizes = [8, 32], strides = [1, 1]} : vector<8x128xf32> to vector<8x32xf32>
    %135 = math.tanh %134 : vector<8x32xf32>
    %136 = arith.mulf %132, %119 : vector<8x32xf32>
    %137 = arith.mulf %131, %135 : vector<8x32xf32>
    %138 = arith.addf %136, %137 : vector<8x32xf32>
    %139 = math.tanh %138 : vector<8x32xf32>
    %140 = arith.mulf %133, %139 : vector<8x32xf32>
    %c48 = arith.constant 48 : index
    %c0_32 = arith.constant 0 : index
    %141 = vector.load %arg11[%c48, %c0_32] : memref<64x32xf32, #tpu.memory_space<vmem>>, vector<8x32xf32>
    tpu.vector_store %arg11[%c48, %c0_32], %140 {strides = array<i32>} : memref<64x32xf32, #tpu.memory_space<vmem>>, vector<8x32xf32>,
    %142 = vector.extract_strided_slice %5 {offsets = [56, 0], sizes = [8, 128], strides = [1, 1]} : vector<64x128xf32> to vector<8x128xf32>
    %cst_33 = arith.constant dense<0.000000e+00> : vector<8x128xf32>
    %143 = tpu.matmul %140, %6, %cst_33 {dimension_numbers = #tpu.dot_dimension_numbers<[1], [0], [0], [1], [0, 0, 1, 1], [], []>} : vector<8x32xf32>, vector<32x128xf32>, vector<8x128xf32> -> vector<8x128xf32>
    %144 = arith.addf %142, %143 : vector<8x128xf32>
    %145 = arith.negf %144 : vector<8x128xf32>
    %146 = math.exp %145 : vector<8x128xf32>
    %cst_34 = arith.constant 1.000000e+00 : f32
    %147 = vector.broadcast %cst_34 : f32 to vector<8x128xf32>
    %148 = arith.addf %147, %146 : vector<8x128xf32>
    %149 = arith.divf %147, %148 : vector<8x128xf32>
    %150 = vector.extract_strided_slice %149 {offsets = [0, 0], sizes = [8, 32], strides = [1, 1]} : vector<8x128xf32> to vector<8x32xf32>
    %151 = vector.extract_strided_slice %149 {offsets = [0, 32], sizes = [8, 32], strides = [1, 1]} : vector<8x128xf32> to vector<8x32xf32>
    %152 = vector.extract_strided_slice %149 {offsets = [0, 96], sizes = [8, 32], strides = [1, 1]} : vector<8x128xf32> to vector<8x32xf32>
    %153 = vector.extract_strided_slice %144 {offsets = [0, 64], sizes = [8, 32], strides = [1, 1]} : vector<8x128xf32> to vector<8x32xf32>
    %154 = math.tanh %153 : vector<8x32xf32>
    %155 = arith.mulf %151, %138 : vector<8x32xf32>
    %156 = arith.mulf %150, %154 : vector<8x32xf32>
    %157 = arith.addf %155, %156 : vector<8x32xf32>
    %158 = math.tanh %157 : vector<8x32xf32>
    %159 = arith.mulf %152, %158 : vector<8x32xf32>
    %c56 = arith.constant 56 : index
    %c0_35 = arith.constant 0 : index
    %160 = vector.load %arg11[%c56, %c0_35] : memref<64x32xf32, #tpu.memory_space<vmem>>, vector<8x32xf32>
    tpu.vector_store %arg11[%c56, %c0_35], %159 {strides = array<i32>} : memref<64x32xf32, #tpu.memory_space<vmem>>, vector<8x32xf32>,
    %c0_36 = arith.constant 0 : index
    %c0_37 = arith.constant 0 : index
    %161 = vector.load %arg9[%c0_36, %c0_37] : memref<8x32xf32, #tpu.memory_space<vmem>>, vector<8x32xf32>
    tpu.vector_store %arg9[%c0_36, %c0_37], %159 {strides = array<i32>} : memref<8x32xf32, #tpu.memory_space<vmem>>, vector<8x32xf32>,
    %c0_38 = arith.constant 0 : index
    %c0_39 = arith.constant 0 : index
    %162 = vector.load %arg10[%c0_38, %c0_39] : memref<8x32xf32, #tpu.memory_space<vmem>>, vector<8x32xf32>
    tpu.vector_store %arg10[%c0_38, %c0_39], %157 {strides = array<i32>} : memref<8x32xf32, #tpu.memory_space<vmem>>, vector<8x32xf32>,
    %cst_40 = arith.constant 0.000000e+00 : f32
    %163 = vector.broadcast %cst_40 : f32 to vector<8x32xf32>
    %c0_41 = arith.constant 0 : index
    %c0_42 = arith.constant 0 : index
    %164 = tpu.strided_load %arg11[%c0_41, %c0_42] {strides = array<i32: 8, 1>} : memref<64x32xf32, #tpu.memory_space<vmem>>, vector<8x32xf32>
    %c0_43 = arith.constant 0 : index
    %c0_44 = arith.constant 0 : index
    %165 = vector.load %arg4[%c0_43, %c0_44] : memref<256x32xf32, #tpu.memory_space<vmem>>, vector<32x32xf32>
    %cst_45 = arith.constant dense<0.000000e+00> : vector<8x32xf32>
    %166 = tpu.matmul %164, %165, %cst_45 {dimension_numbers = #tpu.dot_dimension_numbers<[1], [0], [0], [1], [0, 0, 1, 1], [], []>} : vector<8x32xf32>, vector<32x32xf32>, vector<8x32xf32> -> vector<8x32xf32>
    %167 = arith.addf %163, %166 : vector<8x32xf32>
    %c1 = arith.constant 1 : index
    %c0_46 = arith.constant 0 : index
    %168 = tpu.strided_load %arg11[%c1, %c0_46] {strides = array<i32: 8, 1>} : memref<64x32xf32, #tpu.memory_space<vmem>>, vector<8x32xf32>
    %c32_47 = arith.constant 32 : index
    %c0_48 = arith.constant 0 : index
    %169 = vector.load %arg4[%c32_47, %c0_48] : memref<256x32xf32, #tpu.memory_space<vmem>>, vector<32x32xf32>
    %cst_49 = arith.constant dense<0.000000e+00> : vector<8x32xf32>
    %170 = tpu.matmul %168, %169, %cst_49 {dimension_numbers = #tpu.dot_dimension_numbers<[1], [0], [0], [1], [0, 0, 1, 1], [], []>} : vector<8x32xf32>, vector<32x32xf32>, vector<8x32xf32> -> vector<8x32xf32>
    %171 = arith.addf %167, %170 : vector<8x32xf32>
    %c2 = arith.constant 2 : index
    %c0_50 = arith.constant 0 : index
    %172 = tpu.strided_load %arg11[%c2, %c0_50] {strides = array<i32: 8, 1>} : memref<64x32xf32, #tpu.memory_space<vmem>>, vector<8x32xf32>
    %c64 = arith.constant 64 : index
    %c0_51 = arith.constant 0 : index
    %173 = vector.load %arg4[%c64, %c0_51] : memref<256x32xf32, #tpu.memory_space<vmem>>, vector<32x32xf32>
    %cst_52 = arith.constant dense<0.000000e+00> : vector<8x32xf32>
    %174 = tpu.matmul %172, %173, %cst_52 {dimension_numbers = #tpu.dot_dimension_numbers<[1], [0], [0], [1], [0, 0, 1, 1], [], []>} : vector<8x32xf32>, vector<32x32xf32>, vector<8x32xf32> -> vector<8x32xf32>
    %175 = arith.addf %171, %174 : vector<8x32xf32>
    %c3 = arith.constant 3 : index
    %c0_53 = arith.constant 0 : index
    %176 = tpu.strided_load %arg11[%c3, %c0_53] {strides = array<i32: 8, 1>} : memref<64x32xf32, #tpu.memory_space<vmem>>, vector<8x32xf32>
    %c96 = arith.constant 96 : index
    %c0_54 = arith.constant 0 : index
    %177 = vector.load %arg4[%c96, %c0_54] : memref<256x32xf32, #tpu.memory_space<vmem>>, vector<32x32xf32>
    %cst_55 = arith.constant dense<0.000000e+00> : vector<8x32xf32>
    %178 = tpu.matmul %176, %177, %cst_55 {dimension_numbers = #tpu.dot_dimension_numbers<[1], [0], [0], [1], [0, 0, 1, 1], [], []>} : vector<8x32xf32>, vector<32x32xf32>, vector<8x32xf32> -> vector<8x32xf32>
    %179 = arith.addf %175, %178 : vector<8x32xf32>
    %c4 = arith.constant 4 : index
    %c0_56 = arith.constant 0 : index
    %180 = tpu.strided_load %arg11[%c4, %c0_56] {strides = array<i32: 8, 1>} : memref<64x32xf32, #tpu.memory_space<vmem>>, vector<8x32xf32>
    %c128 = arith.constant 128 : index
    %c0_57 = arith.constant 0 : index
    %181 = vector.load %arg4[%c128, %c0_57] : memref<256x32xf32, #tpu.memory_space<vmem>>, vector<32x32xf32>
    %cst_58 = arith.constant dense<0.000000e+00> : vector<8x32xf32>
    %182 = tpu.matmul %180, %181, %cst_58 {dimension_numbers = #tpu.dot_dimension_numbers<[1], [0], [0], [1], [0, 0, 1, 1], [], []>} : vector<8x32xf32>, vector<32x32xf32>, vector<8x32xf32> -> vector<8x32xf32>
    %183 = arith.addf %179, %182 : vector<8x32xf32>
    %c5 = arith.constant 5 : index
    %c0_59 = arith.constant 0 : index
    %184 = tpu.strided_load %arg11[%c5, %c0_59] {strides = array<i32: 8, 1>} : memref<64x32xf32, #tpu.memory_space<vmem>>, vector<8x32xf32>
    %c160 = arith.constant 160 : index
    %c0_60 = arith.constant 0 : index
    %185 = vector.load %arg4[%c160, %c0_60] : memref<256x32xf32, #tpu.memory_space<vmem>>, vector<32x32xf32>
    %cst_61 = arith.constant dense<0.000000e+00> : vector<8x32xf32>
    %186 = tpu.matmul %184, %185, %cst_61 {dimension_numbers = #tpu.dot_dimension_numbers<[1], [0], [0], [1], [0, 0, 1, 1], [], []>} : vector<8x32xf32>, vector<32x32xf32>, vector<8x32xf32> -> vector<8x32xf32>
    %187 = arith.addf %183, %186 : vector<8x32xf32>
    %c6 = arith.constant 6 : index
    %c0_62 = arith.constant 0 : index
    %188 = tpu.strided_load %arg11[%c6, %c0_62] {strides = array<i32: 8, 1>} : memref<64x32xf32, #tpu.memory_space<vmem>>, vector<8x32xf32>
    %c192 = arith.constant 192 : index
    %c0_63 = arith.constant 0 : index
    %189 = vector.load %arg4[%c192, %c0_63] : memref<256x32xf32, #tpu.memory_space<vmem>>, vector<32x32xf32>
    %cst_64 = arith.constant dense<0.000000e+00> : vector<8x32xf32>
    %190 = tpu.matmul %188, %189, %cst_64 {dimension_numbers = #tpu.dot_dimension_numbers<[1], [0], [0], [1], [0, 0, 1, 1], [], []>} : vector<8x32xf32>, vector<32x32xf32>, vector<8x32xf32> -> vector<8x32xf32>
    %191 = arith.addf %187, %190 : vector<8x32xf32>
    %c7 = arith.constant 7 : index
    %c0_65 = arith.constant 0 : index
    %192 = tpu.strided_load %arg11[%c7, %c0_65] {strides = array<i32: 8, 1>} : memref<64x32xf32, #tpu.memory_space<vmem>>, vector<8x32xf32>
    %c224 = arith.constant 224 : index
    %c0_66 = arith.constant 0 : index
    %193 = vector.load %arg4[%c224, %c0_66] : memref<256x32xf32, #tpu.memory_space<vmem>>, vector<32x32xf32>
    %cst_67 = arith.constant dense<0.000000e+00> : vector<8x32xf32>
    %194 = tpu.matmul %192, %193, %cst_67 {dimension_numbers = #tpu.dot_dimension_numbers<[1], [0], [0], [1], [0, 0, 1, 1], [], []>} : vector<8x32xf32>, vector<32x32xf32>, vector<8x32xf32> -> vector<8x32xf32>
    %195 = arith.addf %191, %194 : vector<8x32xf32>
    %c0_68 = arith.constant 0 : index
    %c0_69 = arith.constant 0 : index
    %196 = vector.load %arg5[%c0_68, %c0_69] : memref<1x32xf32, #tpu.memory_space<vmem>>, vector<1x32xf32>
    %197 = vector.broadcast %196 : vector<1x32xf32> to vector<8x32xf32>
    %198 = arith.addf %195, %197 : vector<8x32xf32>
    %c0_70 = arith.constant 0 : index
    %c0_71 = arith.constant 0 : index
    %199 = vector.load %arg8[%c0_70, %c0_71] : memref<8x32xf32, #tpu.memory_space<vmem>>, vector<8x32xf32>
    tpu.vector_store %arg8[%c0_70, %c0_71], %198 {strides = array<i32>} : memref<8x32xf32, #tpu.memory_space<vmem>>, vector<8x32xf32>,
    return
  }
}

</mosaic_0001>

<llo_original>
// kernel: generator_forward.1
$region0: #{generator_forward.1}
  #allocation0 [shape = 'u32[]', space=smem, size = 0x4, offset = 0x4, fixed_abs, tag = 'smem constant byte address 0x4 - core index']
  #allocation1 [shape = 'u32[144,128]{1,0:T(1,128)}', space=vmem, size = 0x12000, scoped, tag = 'internal scratch']
  #allocation2 [shape = 'f32[64,32]{1,0:T(8,128)}', space=vmem, size = 0x8000, scoped, tag = 'scratch operand']
  %s0 = inlined_call_operand.vmem [shape: f32[64,16], index: 0, kind: input, shape index: {}]
  %s1 = inlined_call_operand.vmem [shape: f32[16,128], index: 1, kind: input, shape index: {}]
  %s2 = inlined_call_operand.vmem [shape: f32[32,128], index: 2, kind: input, shape index: {}]
  %s3 = inlined_call_operand.vmem [shape: f32[1,128], index: 3, kind: input, shape index: {}]
  %s4 = inlined_call_operand.vmem [shape: f32[256,32], index: 4, kind: input, shape index: {}]
  %s5 = inlined_call_operand.vmem [shape: f32[1,32], index: 5, kind: input, shape index: {}]
  %s6 = inlined_call_operand.vmem [shape: f32[8,32], index: 6, kind: input, shape index: {}, may-alias: {6,7}]
  %s7 = inlined_call_operand.vmem [shape: f32[8,32], index: 7, kind: input, shape index: {}, may-alias: {6,7}]
  %s8 = inlined_call_operand.vmem [shape: f32[8,32], index: 8, kind: output, shape index: {0}]
  %s9 = inlined_call_operand.hbm [shape: f32[8,32], index: 9, kind: output, shape index: {1}]
  %s10 = inlined_call_operand.hbm [shape: f32[8,32], index: 10, kind: output, shape index: {2}]
  %11 = xla_tuple %s8, %s9, %s10
  %s12 = sld [smem:[#allocation0]]
  $region58: #{generator_forward.1} parent=0
    _
  %s14 = ssub.s32 1, %s12
  %s15 = scalar_select 0, %s14, %s12
  $region1: #{generator_forward.1} parent=0
    #allocation3 [shape = 'u8[4096]{0}', space=vmem, size = 0x1000, scoped, tag = 'output window, operand 1, single buffered']
    #allocation4 [shape = 's32[1]{0}', space=sflag, size = 0x4, scoped, tag = 'scoped memory for generator_forward.1']
    #allocation5 [shape = 'u8[4096]{0}', space=vmem, size = 0x1000, scoped, tag = 'output window, operand 2, single buffered']
    #allocation6 [shape = 's32[1]{0}', space=sflag, size = 0x4, scoped, tag = 'scoped memory for generator_forward.1']
    %16 = vsyncpa [#allocation4], 0
    %17 = vsyncpa [#allocation6], 0
    // Predicated region
    $region2: #{generator_forward.1} parent=1 // pred_check
      _
    $region3: #{generator_forward.1} parent=1 // pred_check_branch
      %19 = sbr.rel (0) target = $region5
    $region4: #{generator_forward.1} parent=1 // pred_region
      _
    $region5: #{generator_forward.1} parent=1 // pred_fallthru
      _
    // Predicated region
    $region6: #{generator_forward.1} parent=1 // pred_check
      _
    $region7: #{generator_forward.1} parent=1 // pred_check_branch
      %21 = sbr.rel (0) target = $region9
    $region8: #{generator_forward.1} parent=1 // pred_region
      _
    $region9: #{generator_forward.1} parent=1 // pred_fallthru
      _
    // Predicated region
    $region10: #{generator_forward.1} parent=1 // pred_check
      _
    $region11: #{generator_forward.1} parent=1 // pred_check_branch
      %23 = sbr.rel (0) target = $region13
    $region12: #{generator_forward.1} parent=1 // pred_region
      _
    $region13: #{generator_forward.1} parent=1 // pred_fallthru
      _
    // Predicated region
    $region14: #{generator_forward.1} parent=1 // pred_check
      _
    $region15: #{generator_forward.1} parent=1 // pred_check_branch
      %25 = sbr.rel (0) target = $region17
    $region16: #{generator_forward.1} parent=1 // pred_region
      _
    $region17: #{generator_forward.1} parent=1 // pred_fallthru
      _
    // Predicated region
    $region18: #{generator_forward.1} parent=1 // pred_check
      _
    $region19: #{generator_forward.1} parent=1 // pred_check_branch
      %27 = sbr.rel (0) target = $region21
    $region20: #{generator_forward.1} parent=1 // pred_region
      _
    $region21: #{generator_forward.1} parent=1 // pred_fallthru
      _
    // Predicated region
    $region22: #{generator_forward.1} parent=1 // pred_check
      _
    $region23: #{generator_forward.1} parent=1 // pred_check_branch
      %29 = sbr.rel (0) target = $region25
    $region24: #{generator_forward.1} parent=1 // pred_region
      _
    $region25: #{generator_forward.1} parent=1 // pred_fallthru
      _
    // Predicated region
    $region26: #{generator_forward.1} parent=1 // pred_check
      _
    $region27: #{generator_forward.1} parent=1 // pred_check_branch
      %31 = sbr.rel (0) target = $region29
    $region28: #{generator_forward.1} parent=1 // pred_region
      _
    $region29: #{generator_forward.1} parent=1 // pred_fallthru
      _
    // Predicated region
    $region30: #{generator_forward.1} parent=1 // pred_check
      _
    $region31: #{generator_forward.1} parent=1 // pred_check_branch
      %33 = sbr.rel (0) target = $region33
    $region32: #{generator_forward.1} parent=1 // pred_region
      _
    $region33: #{generator_forward.1} parent=1 // pred_fallthru
      _
    %v34 = vld [vmem:[%s0] sm:$0xff]
    %v35 = vld [vmem:[%s0 + $0x8] sm:$0xff]
    %v36 = vld [vmem:[%s0 + $0x10] sm:$0xff]
    %v37 = vld [vmem:[%s0 + $0x18] sm:$0xff]
    %v38 = vld [vmem:[%s0 + $0x20] sm:$0xff]
    %v39 = vld [vmem:[%s0 + $0x28] sm:$0xff]
    %v40 = vld [vmem:[%s0 + $0x30] sm:$0xff]
    %v41 = vld [vmem:[%s0 + $0x38] sm:$0xff]
    %v42 = vld [vmem:[%s1] sm:$0xff]
    %v43 = vld [vmem:[%s1 + $0x8] sm:$0xff]
    %v44 = vld [vmem:[%s3] sm:$0x1]
    %v46 = vlaneseq
    %v47 = vshrl.u32 %v46, 7
    %v48 = vsub.s32 0, %v47
    %v49 = vrot.slane %v44, %v48
    %vm51 = vcmask 130048
    %v53 = vsel %vm51, %v34, 0
    %v56 = vsel %vm51, %v35, 0
    %v59 = vsel %vm51, %v36, 0
    %v62 = vsel %vm51, %v37, 0
    %v65 = vsel %vm51, %v38, 0
    %v68 = vsel %vm51, %v39, 0
    %v71 = vsel %vm51, %v40, 0
    %v74 = vsel %vm51, %v41, 0
    %76 = vmatprep.subr.mxu0 0.0
    %77 = vmatpush1.msra.mxu0 %v42
    %78 = vmatprep.subr.mxu0 0.0
    %79 = vmatpush1.msra.mxu0 %v43
    %80 = vmatprep.subr.mxu0 0.0
    %81 = vmatpush1.msra.mxu0 0.0
    %82 = vmatprep.subr.mxu0 0.0
    %83 = vmatpush1.msra.mxu0 0.0
    %84 = vmatprep.subr.mxu0 0.0
    %85 = vmatpush1.msra.mxu0 0.0
    %86 = vmatprep.subr.mxu0 0.0
    %87 = vmatpush1.msra.mxu0 0.0
    %88 = vmatprep.subr.mxu0 0.0
    %89 = vmatpush1.msra.mxu0 0.0
    %90 = vmatprep.subr.mxu0 0.0
    %91 = vmatpush1.msra.mxu0 0.0
    %92 = vmatprep.subr.mxu0 0.0
    %93 = vmatpush1.msra.mxu0 0.0
    %94 = vmatprep.subr.mxu0 0.0
    %95 = vmatpush1.msra.mxu0 0.0
    %96 = vmatprep.subr.mxu0 0.0
    %97 = vmatpush1.msra.mxu0 0.0
    %98 = vmatprep.subr.mxu0 0.0
    %99 = vmatpush1.msra.mxu0 0.0
    %100 = vmatprep.subr.mxu0 0.0
    %101 = vmatpush1.msra.mxu0 0.0
    %102 = vmatprep.subr.mxu0 0.0
    %103 = vmatpush1.msra.mxu0 0.0
    %104 = vmatprep.subr.mxu0 0.0
    %105 = vmatpush1.msra.mxu0 0.0
    %106 = vmatprep.subr.mxu0 0.0
    %107 = vmatpush1.msra.mxu0 0.0
    %108 = vmatprep.subr.mxu0 0.0
    %109 = vmatpush1.msra.mxu0 0.0
    %110 = vmatprep.subr.mxu0 0.0
    %111 = vmatpush1.msra.mxu0 0.0
    %112 = vmatprep.subr.mxu0 0.0
    %113 = vmatpush1.msra.mxu0 0.0
    %114 = vmatprep.subr.mxu0 0.0
    %115 = vmatpush1.msra.mxu0 0.0
    %116 = vmatprep.subr.mxu0 0.0
    %117 = vmatpush1.msra.mxu0 0.0
    %118 = vmatprep.subr.mxu0 0.0
    %119 = vmatpush1.msra.mxu0 0.0
    %120 = vmatprep.subr.mxu0 0.0
    %121 = vmatpush1.msra.mxu0 0.0
    %122 = vmatprep.subr.mxu0 0.0
    %123 = vmatpush1.msra.mxu0 0.0
    %124 = vmatprep.subr.mxu0 0.0
    %125 = vmatpush1.msra.mxu0 0.0
    %126 = vmatprep.subr.mxu0 0.0
    %127 = vmatpush1.msra.mxu0 0.0
    %128 = vmatprep.subr.mxu0 0.0
    %129 = vmatpush1.msra.mxu0 0.0
    %130 = vmatprep.subr.mxu0 0.0
    %131 = vmatpush1.msra.mxu0 0.0
    %132 = vmatprep.subr.mxu0 0.0
    %133 = vmatpush1.msra.mxu0 0.0
    %134 = vmatprep.subr.mxu0 0.0
    %135 = vmatpush1.msra.mxu0 0.0
    %136 = vmatprep.subr.mxu0 0.0
    %137 = vmatpush1.msra.mxu0 0.0
    %138 = vmatprep.subr.mxu0 0.0
    %139 = vmatpush1.msra.mxu0 0.0
    %140 = vmatprep.mubr.f32.mxu0 0.0
    %141 = vmatmul.mubr.f32.gmra.mrb[0].mxu0 %v53
    %v142 = vpop.f32.mrb[0].mxu0
    %v143 = vadd.f32 %v49, %v142
    %v144 = vpop.f32.mrb[0].mxu0
    %145 = vmatprep.mubr.f32.mxu0 0.0
    %146 = vmatmul.mubr.f32.gmra.mrb[0].mxu0 %v56
    %v147 = vpop.f32.mrb[0].mxu0
    %v148 = vadd.f32 %v49, %v147
    %v149 = vpop.f32.mrb[0].mxu0
    %150 = vmatprep.mubr.f32.mxu0 0.0
    %151 = vmatmul.mubr.f32.gmra.mrb[0].mxu0 %v59
    %v152 = vpop.f32.mrb[0].mxu0
    %v153 = vadd.f32 %v49, %v152
    %v154 = vpop.f32.mrb[0].mxu0
    %155 = vmatprep.mubr.f32.mxu0 0.0
    %156 = vmatmul.mubr.f32.gmra.mrb[0].mxu0 %v62
    %v157 = vpop.f32.mrb[0].mxu0
    %v158 = vadd.f32 %v49, %v157
    %v159 = vpop.f32.mrb[0].mxu0
    %160 = vmatprep.mubr.f32.mxu0 0.0
    %161 = vmatmul.mubr.f32.gmra.mrb[0].mxu0 %v65
    %v162 = vpop.f32.mrb[0].mxu0
    %v163 = vadd.f32 %v49, %v162
    %v164 = vpop.f32.mrb[0].mxu0
    %165 = vmatprep.mubr.f32.mxu0 0.0
    %166 = vmatmul.mubr.f32.gmra.mrb[0].mxu0 %v68
    %v167 = vpop.f32.mrb[0].mxu0
    %v168 = vadd.f32 %v49, %v167
    %v169 = vpop.f32.mrb[0].mxu0
    %170 = vmatprep.mubr.f32.mxu0 0.0
    %171 = vmatmul.mubr.f32.gmra.mrb[0].mxu0 %v71
    %v172 = vpop.f32.mrb[0].mxu0
    %v173 = vadd.f32 %v49, %v172
    %v174 = vpop.f32.mrb[0].mxu0
    %175 = vmatprep.mubr.f32.mxu0 0.0
    %176 = vmatmul.mubr.f32.gmra.mrb[0].mxu0 %v74
    %v177 = vpop.f32.mrb[0].mxu0
    %v178 = vadd.f32 %v49, %v177
    %v179 = vpop.f32.mrb[0].mxu0
    %180 = vdwg.mxu0
    %v181 = vld [vmem:[%s2] sm:$0xff]
    %v182 = vld [vmem:[%s2 + $0x8] sm:$0xff]
    %v183 = vld [vmem:[%s2 + $0x10] sm:$0xff]
    %v184 = vld [vmem:[%s2 + $0x18] sm:$0xff]
    %v185 = vld [vmem:[%s6] sm:$0xff]
    %v186 = vld [vmem:[%s7] sm:$0xff]
    %vm187 = vcmask 261120
    %v189 = vsel %vm187, %v185, 0
    %191 = vmatprep.subr.mxu0 0.0
    %192 = vmatpush1.msra.mxu0 %v181
    %193 = vmatprep.subr.mxu0 0.0
    %194 = vmatpush1.msra.mxu0 %v182
    %195 = vmatprep.subr.mxu0 0.0
    %196 = vmatpush1.msra.mxu0 %v183
    %197 = vmatprep.subr.mxu0 0.0
    %198 = vmatpush1.msra.mxu0 %v184
    %199 = vmatprep.subr.mxu0 0.0
    %200 = vmatpush1.msra.mxu0 0.0
    %201 = vmatprep.subr.mxu0 0.0
    %202 = vmatpush1.msra.mxu0 0.0
    %203 = vmatprep.subr.mxu0 0.0
    %204 = vmatpush1.msra.mxu0 0.0
    %205 = vmatprep.subr.mxu0 0.0
    %206 = vmatpush1.msra.mxu0 0.0
    %207 = vmatprep.subr.mxu0 0.0
    %208 = vmatpush1.msra.mxu0 0.0
    %209 = vmatprep.subr.mxu0 0.0
    %210 = vmatpush1.msra.mxu0 0.0
    %211 = vmatprep.subr.mxu0 0.0
    %212 = vmatpush1.msra.mxu0 0.0
    %213 = vmatprep.subr.mxu0 0.0
    %214 = vmatpush1.msra.mxu0 0.0
    %215 = vmatprep.subr.mxu0 0.0
    %216 = vmatpush1.msra.mxu0 0.0
    %217 = vmatprep.subr.mxu0 0.0
    %218 = vmatpush1.msra.mxu0 0.0
    %219 = vmatprep.subr.mxu0 0.0
    %220 = vmatpush1.msra.mxu0 0.0
    %221 = vmatprep.subr.mxu0 0.0
    %222 = vmatpush1.msra.mxu0 0.0
    %223 = vmatprep.subr.mxu0 0.0
    %224 = vmatpush1.msra.mxu0 0.0
    %225 = vmatprep.subr.mxu0 0.0
    %226 = vmatpush1.msra.mxu0 0.0
    %227 = vmatprep.subr.mxu0 0.0
    %228 = vmatpush1.msra.mxu0 0.0
    %229 = vmatprep.subr.mxu0 0.0
    %230 = vmatpush1.msra.mxu0 0.0
    %231 = vmatprep.subr.mxu0 0.0
    %232 = vmatpush1.msra.mxu0 0.0
    %233 = vmatprep.subr.mxu0 0.0
    %234 = vmatpush1.msra.mxu0 0.0
    %235 = vmatprep.subr.mxu0 0.0
    %236 = vmatpush1.msra.mxu0 0.0
    %237 = vmatprep.subr.mxu0 0.0
    %238 = vmatpush1.msra.mxu0 0.0
    %239 = vmatprep.subr.mxu0 0.0
    %240 = vmatpush1.msra.mxu0 0.0
    %241 = vmatprep.subr.mxu0 0.0
    %242 = vmatpush1.msra.mxu0 0.0
    %243 = vmatprep.subr.mxu0 0.0
    %244 = vmatpush1.msra.mxu0 0.0
    %245 = vmatprep.subr.mxu0 0.0
    %246 = vmatpush1.msra.mxu0 0.0
    %247 = vmatprep.subr.mxu0 0.0
    %248 = vmatpush1.msra.mxu0 0.0
    %249 = vmatprep.subr.mxu0 0.0
    %250 = vmatpush1.msra.mxu0 0.0
    %251 = vmatprep.subr.mxu0 0.0
    %252 = vmatpush1.msra.mxu0 0.0
    %253 = vmatprep.subr.mxu0 0.0
    %254 = vmatpush1.msra.mxu0 0.0
    %255 = vmatprep.mubr.f32.mxu0 0.0
    %256 = vmatmul.mubr.f32.gmra.mrb[0].mxu0 %v189
    %v257 = vpop.f32.mrb[0].mxu0
    %v258 = vadd.f32 0.0, %v257
    %v259 = vpop.f32.mrb[0].mxu0
    %260 = vdwg.mxu0
    %v261 = vadd.f32 %v143, %v258
    %v262 = vxor.u32 %v261, 2147483648
    %v263 = vmul.f32 %v262, 1.442695
    %v264 = vpow.pop %v263
    %v265 = vadd.f32 %v264, 1.0
    %v266 = vrcp.pop %v265
    %v267 = vmul.f32 1.0, %v266
    %v268 = vtanh.pop %v261
    %270 = vrot.lane.b32.xlu0 %v186, 32
    %v271 = vpop.permute.xlu0 %270
    %v273 = vmul.f32 %v267, %v271
    %275 = vrot.lane.b32.xlu0 %v268, 64
    %v276 = vpop.permute.xlu0 %275
    %v278 = vmul.f32 %v267, %v276
    %280 = vrot.lane.b32.xlu0 %v278, 32
    %v281 = vpop.permute.xlu0 %280
    %v283 = vadd.f32 %v273, %v281
    %v284 = vtanh.pop %v283
    %286 = vrot.lane.b32.xlu0 %v284, 64
    %v287 = vpop.permute.xlu0 %286
    %v289 = vmul.f32 %v267, %v287
    %291 = vrot.lane.b32.xlu0 %v289, 32
    %v292 = vpop.permute.xlu0 %291
    %294 = vst.msk [vmem:[#allocation2] sm:$0xff] %vm187, %v292
    %v295 = vsel %vm187, %v292, 0
    %297 = vmatprep.subr.mxu0 0.0
    %298 = vmatpush1.msra.mxu0 %v181
    %299 = vmatprep.subr.mxu0 0.0
    %300 = vmatpush1.msra.mxu0 %v182
    %301 = vmatprep.subr.mxu0 0.0
    %302 = vmatpush1.msra.mxu0 %v183
    %303 = vmatprep.subr.mxu0 0.0
    %304 = vmatpush1.msra.mxu0 %v184
    %305 = vmatprep.subr.mxu0 0.0
    %306 = vmatpush1.msra.mxu0 0.0
    %307 = vmatprep.subr.mxu0 0.0
    %308 = vmatpush1.msra.mxu0 0.0
    %309 = vmatprep.subr.mxu0 0.0
    %310 = vmatpush1.msra.mxu0 0.0
    %311 = vmatprep.subr.mxu0 0.0
    %312 = vmatpush1.msra.mxu0 0.0
    %313 = vmatprep.subr.mxu0 0.0
    %314 = vmatpush1.msra.mxu0 0.0
    %315 = vmatprep.subr.mxu0 0.0
    %316 = vmatpush1.msra.mxu0 0.0
    %317 = vmatprep.subr.mxu0 0.0
    %318 = vmatpush1.msra.mxu0 0.0
    %319 = vmatprep.subr.mxu0 0.0
    %320 = vmatpush1.msra.mxu0 0.0
    %321 = vmatprep.subr.mxu0 0.0
    %322 = vmatpush1.msra.mxu0 0.0
    %323 = vmatprep.subr.mxu0 0.0
    %324 = vmatpush1.msra.mxu0 0.0
    %325 = vmatprep.subr.mxu0 0.0
    %326 = vmatpush1.msra.mxu0 0.0
    %327 = vmatprep.subr.mxu0 0.0
    %328 = vmatpush1.msra.mxu0 0.0
    %329 = vmatprep.subr.mxu0 0.0
    %330 = vmatpush1.msra.mxu0 0.0
    %331 = vmatprep.subr.mxu0 0.0
    %332 = vmatpush1.msra.mxu0 0.0
    %333 = vmatprep.subr.mxu0 0.0
    %334 = vmatpush1.msra.mxu0 0.0
    %335 = vmatprep.subr.mxu0 0.0
    %336 = vmatpush1.msra.mxu0 0.0
    %337 = vmatprep.subr.mxu0 0.0
    %338 = vmatpush1.msra.mxu0 0.0
    %339 = vmatprep.subr.mxu0 0.0
    %340 = vmatpush1.msra.mxu0 0.0
    %341 = vmatprep.subr.mxu0 0.0
    %342 = vmatpush1.msra.mxu0 0.0
    %343 = vmatprep.subr.mxu0 0.0
    %344 = vmatpush1.msra.mxu0 0.0
    %345 = vmatprep.subr.mxu0 0.0
    %346 = vmatpush1.msra.mxu0 0.0
    %347 = vmatprep.subr.mxu0 0.0
    %348 = vmatpush1.msra.mxu0 0.0
    %349 = vmatprep.subr.mxu0 0.0
    %350 = vmatpush1.msra.mxu0 0.0
    %351 = vmatprep.subr.mxu0 0.0
    %352 = vmatpush1.msra.mxu0 0.0
    %353 = vmatprep.subr.mxu0 0.0
    %354 = vmatpush1.msra.mxu0 0.0
    %355 = vmatprep.subr.mxu0 0.0
    %356 = vmatpush1.msra.mxu0 0.0
    %357 = vmatprep.subr.mxu0 0.0
    %358 = vmatpush1.msra.mxu0 0.0
    %359 = vmatprep.subr.mxu0 0.0
    %360 = vmatpush1.msra.mxu0 0.0
    %361 = vmatprep.mubr.f32.mxu0 0.0
    %362 = vmatmul.mubr.f32.gmra.mrb[0].mxu0 %v295
    %v363 = vpop.f32.mrb[0].mxu0
    %v364 = vadd.f32 0.0, %v363
    %v365 = vpop.f32.mrb[0].mxu0
    %366 = vdwg.mxu0
    %v367 = vadd.f32 %v148, %v364
    %v368 = vxor.u32 %v367, 2147483648
    %v369 = vmul.f32 %v368, 1.442695
    %v370 = vpow.pop %v369
    %v371 = vadd.f32 %v370, 1.0
    %v372 = vrcp.pop %v371
    %v373 = vmul.f32 1.0, %v372
    %v374 = vtanh.pop %v367
    %v375 = vmul.f32 %v373, %v283
    %377 = vrot.lane.b32.xlu0 %v374, 64
    %v378 = vpop.permute.xlu0 %377
    %v380 = vmul.f32 %v373, %v378
    %382 = vrot.lane.b32.xlu0 %v380, 32
    %v383 = vpop.permute.xlu0 %382
    %v385 = vadd.f32 %v375, %v383
    %v386 = vtanh.pop %v385
    %388 = vrot.lane.b32.xlu0 %v386, 64
    %v389 = vpop.permute.xlu0 %388
    %v391 = vmul.f32 %v373, %v389
    %393 = vrot.lane.b32.xlu0 %v391, 32
    %v394 = vpop.permute.xlu0 %393
    %396 = vst.msk [vmem:[#allocation2 + $0x8] sm:$0xff] %vm187, %v394
    %v397 = vsel %vm187, %v394, 0
    %399 = vmatprep.subr.mxu0 0.0
    %400 = vmatpush1.msra.mxu0 %v181
    %401 = vmatprep.subr.mxu0 0.0
    %402 = vmatpush1.msra.mxu0 %v182
    %403 = vmatprep.subr.mxu0 0.0
    %404 = vmatpush1.msra.mxu0 %v183
    %405 = vmatprep.subr.mxu0 0.0
    %406 = vmatpush1.msra.mxu0 %v184
    %407 = vmatprep.subr.mxu0 0.0
    %408 = vmatpush1.msra.mxu0 0.0
    %409 = vmatprep.subr.mxu0 0.0
    %410 = vmatpush1.msra.mxu0 0.0
    %411 = vmatprep.subr.mxu0 0.0
    %412 = vmatpush1.msra.mxu0 0.0
    %413 = vmatprep.subr.mxu0 0.0
    %414 = vmatpush1.msra.mxu0 0.0
    %415 = vmatprep.subr.mxu0 0.0
    %416 = vmatpush1.msra.mxu0 0.0
    %417 = vmatprep.subr.mxu0 0.0
    %418 = vmatpush1.msra.mxu0 0.0
    %419 = vmatprep.subr.mxu0 0.0
    %420 = vmatpush1.msra.mxu0 0.0
    %421 = vmatprep.subr.mxu0 0.0
    %422 = vmatpush1.msra.mxu0 0.0
    %423 = vmatprep.subr.mxu0 0.0
    %424 = vmatpush1.msra.mxu0 0.0
    %425 = vmatprep.subr.mxu0 0.0
    %426 = vmatpush1.msra.mxu0 0.0
    %427 = vmatprep.subr.mxu0 0.0
    %428 = vmatpush1.msra.mxu0 0.0
    %429 = vmatprep.subr.mxu0 0.0
    %430 = vmatpush1.msra.mxu0 0.0
    %431 = vmatprep.subr.mxu0 0.0
    %432 = vmatpush1.msra.mxu0 0.0
    %433 = vmatprep.subr.mxu0 0.0
    %434 = vmatpush1.msra.mxu0 0.0
    %435 = vmatprep.subr.mxu0 0.0
    %436 = vmatpush1.msra.mxu0 0.0
    %437 = vmatprep.subr.mxu0 0.0
    %438 = vmatpush1.msra.mxu0 0.0
    %439 = vmatprep.subr.mxu0 0.0
    %440 = vmatpush1.msra.mxu0 0.0
    %441 = vmatprep.subr.mxu0 0.0
    %442 = vmatpush1.msra.mxu0 0.0
    %443 = vmatprep.subr.mxu0 0.0
    %444 = vmatpush1.msra.mxu0 0.0
    %445 = vmatprep.subr.mxu0 0.0
    %446 = vmatpush1.msra.mxu0 0.0
    %447 = vmatprep.subr.mxu0 0.0
    %448 = vmatpush1.msra.mxu0 0.0
    %449 = vmatprep.subr.mxu0 0.0
    %450 = vmatpush1.msra.mxu0 0.0
    %451 = vmatprep.subr.mxu0 0.0
    %452 = vmatpush1.msra.mxu0 0.0
    %453 = vmatprep.subr.mxu0 0.0
    %454 = vmatpush1.msra.mxu0 0.0
    %455 = vmatprep.subr.mxu0 0.0
    %456 = vmatpush1.msra.mxu0 0.0
    %457 = vmatprep.subr.mxu0 0.0
    %458 = vmatpush1.msra.mxu0 0.0
    %459 = vmatprep.subr.mxu0 0.0
    %460 = vmatpush1.msra.mxu0 0.0
    %461 = vmatprep.subr.mxu0 0.0
    %462 = vmatpush1.msra.mxu0 0.0
    %463 = vmatprep.mubr.f32.mxu0 0.0
    %464 = vmatmul.mubr.f32.gmra.mrb[0].mxu0 %v397
    %v465 = vpop.f32.mrb[0].mxu0
    %v466 = vadd.f32 0.0, %v465
    %v467 = vpop.f32.mrb[0].mxu0
    %468 = vdwg.mxu0
    %v469 = vadd.f32 %v153, %v466
    %v470 = vxor.u32 %v469, 2147483648
    %v471 = vmul.f32 %v470, 1.442695
    %v472 = vpow.pop %v471
    %v473 = vadd.f32 %v472, 1.0
    %v474 = vrcp.pop %v473
    %v475 = vmul.f32 1.0, %v474
    %v476 = vtanh.pop %v469
    %v477 = vmul.f32 %v475, %v385
    %479 = vrot.lane.b32.xlu0 %v476, 64
    %v480 = vpop.permute.xlu0 %479
    %v482 = vmul.f32 %v475, %v480
    %484 = vrot.lane.b32.xlu0 %v482, 32
    %v485 = vpop.permute.xlu0 %484
    %v487 = vadd.f32 %v477, %v485
    %v488 = vtanh.pop %v487
    %490 = vrot.lane.b32.xlu0 %v488, 64
    %v491 = vpop.permute.xlu0 %490
    %v493 = vmul.f32 %v475, %v491
    %495 = vrot.lane.b32.xlu0 %v493, 32
    %v496 = vpop.permute.xlu0 %495
    %498 = vst.msk [vmem:[#allocation2 + $0x10] sm:$0xff] %vm187, %v496
    %v499 = vsel %vm187, %v496, 0
    %501 = vmatprep.subr.mxu0 0.0
    %502 = vmatpush1.msra.mxu0 %v181
    %503 = vmatprep.subr.mxu0 0.0
    %504 = vmatpush1.msra.mxu0 %v182
    %505 = vmatprep.subr.mxu0 0.0
    %506 = vmatpush1.msra.mxu0 %v183
    %507 = vmatprep.subr.mxu0 0.0
    %508 = vmatpush1.msra.mxu0 %v184
    %509 = vmatprep.subr.mxu0 0.0
    %510 = vmatpush1.msra.mxu0 0.0
    %511 = vmatprep.subr.mxu0 0.0
    %512 = vmatpush1.msra.mxu0 0.0
    %513 = vmatprep.subr.mxu0 0.0
    %514 = vmatpush1.msra.mxu0 0.0
    %515 = vmatprep.subr.mxu0 0.0
    %516 = vmatpush1.msra.mxu0 0.0
    %517 = vmatprep.subr.mxu0 0.0
    %518 = vmatpush1.msra.mxu0 0.0
    %519 = vmatprep.subr.mxu0 0.0
    %520 = vmatpush1.msra.mxu0 0.0
    %521 = vmatprep.subr.mxu0 0.0
    %522 = vmatpush1.msra.mxu0 0.0
    %523 = vmatprep.subr.mxu0 0.0
    %524 = vmatpush1.msra.mxu0 0.0
    %525 = vmatprep.subr.mxu0 0.0
    %526 = vmatpush1.msra.mxu0 0.0
    %527 = vmatprep.subr.mxu0 0.0
    %528 = vmatpush1.msra.mxu0 0.0
    %529 = vmatprep.subr.mxu0 0.0
    %530 = vmatpush1.msra.mxu0 0.0
    %531 = vmatprep.subr.mxu0 0.0
    %532 = vmatpush1.msra.mxu0 0.0
    %533 = vmatprep.subr.mxu0 0.0
    %534 = vmatpush1.msra.mxu0 0.0
    %535 = vmatprep.subr.mxu0 0.0
    %536 = vmatpush1.msra.mxu0 0.0
    %537 = vmatprep.subr.mxu0 0.0
    %538 = vmatpush1.msra.mxu0 0.0
    %539 = vmatprep.subr.mxu0 0.0
    %540 = vmatpush1.msra.mxu0 0.0
    %541 = vmatprep.subr.mxu0 0.0
    %542 = vmatpush1.msra.mxu0 0.0
    %543 = vmatprep.subr.mxu0 0.0
    %544 = vmatpush1.msra.mxu0 0.0
    %545 = vmatprep.subr.mxu0 0.0
    %546 = vmatpush1.msra.mxu0 0.0
    %547 = vmatprep.subr.mxu0 0.0
    %548 = vmatpush1.msra.mxu0 0.0
    %549 = vmatprep.subr.mxu0 0.0
    %550 = vmatpush1.msra.mxu0 0.0
    %551 = vmatprep.subr.mxu0 0.0
    %552 = vmatpush1.msra.mxu0 0.0
    %553 = vmatprep.subr.mxu0 0.0
    %554 = vmatpush1.msra.mxu0 0.0
    %555 = vmatprep.subr.mxu0 0.0
    %556 = vmatpush1.msra.mxu0 0.0
    %557 = vmatprep.subr.mxu0 0.0
    %558 = vmatpush1.msra.mxu0 0.0
    %559 = vmatprep.subr.mxu0 0.0
    %560 = vmatpush1.msra.mxu0 0.0
    %561 = vmatprep.subr.mxu0 0.0
    %562 = vmatpush1.msra.mxu0 0.0
    %563 = vmatprep.subr.mxu0 0.0
    %564 = vmatpush1.msra.mxu0 0.0
    %565 = vmatprep.mubr.f32.mxu0 0.0
    %566 = vmatmul.mubr.f32.gmra.mrb[0].mxu0 %v499
    %v567 = vpop.f32.mrb[0].mxu0
    %v568 = vadd.f32 0.0, %v567
    %v569 = vpop.f32.mrb[0].mxu0
    %570 = vdwg.mxu0
    %v571 = vadd.f32 %v158, %v568
    %v572 = vxor.u32 %v571, 2147483648
    %v573 = vmul.f32 %v572, 1.442695
    %v574 = vpow.pop %v573
    %v575 = vadd.f32 %v574, 1.0
    %v576 = vrcp.pop %v575
    %v577 = vmul.f32 1.0, %v576
    %v578 = vtanh.pop %v571
    %v579 = vmul.f32 %v577, %v487
    %581 = vrot.lane.b32.xlu0 %v578, 64
    %v582 = vpop.permute.xlu0 %581
    %v584 = vmul.f32 %v577, %v582
    %586 = vrot.lane.b32.xlu0 %v584, 32
    %v587 = vpop.permute.xlu0 %586
    %v589 = vadd.f32 %v579, %v587
    %v590 = vtanh.pop %v589
    %592 = vrot.lane.b32.xlu0 %v590, 64
    %v593 = vpop.permute.xlu0 %592
    %v595 = vmul.f32 %v577, %v593
    %597 = vrot.lane.b32.xlu0 %v595, 32
    %v598 = vpop.permute.xlu0 %597
    %600 = vst.msk [vmem:[#allocation2 + $0x18] sm:$0xff] %vm187, %v598
    %v601 = vsel %vm187, %v598, 0
    %603 = vmatprep.subr.mxu0 0.0
    %604 = vmatpush1.msra.mxu0 %v181
    %605 = vmatprep.subr.mxu0 0.0
    %606 = vmatpush1.msra.mxu0 %v182
    %607 = vmatprep.subr.mxu0 0.0
    %608 = vmatpush1.msra.mxu0 %v183
    %609 = vmatprep.subr.mxu0 0.0
    %610 = vmatpush1.msra.mxu0 %v184
    %611 = vmatprep.subr.mxu0 0.0
    %612 = vmatpush1.msra.mxu0 0.0
    %613 = vmatprep.subr.mxu0 0.0
    %614 = vmatpush1.msra.mxu0 0.0
    %615 = vmatprep.subr.mxu0 0.0
    %616 = vmatpush1.msra.mxu0 0.0
    %617 = vmatprep.subr.mxu0 0.0
    %618 = vmatpush1.msra.mxu0 0.0
    %619 = vmatprep.subr.mxu0 0.0
    %620 = vmatpush1.msra.mxu0 0.0
    %621 = vmatprep.subr.mxu0 0.0
    %622 = vmatpush1.msra.mxu0 0.0
    %623 = vmatprep.subr.mxu0 0.0
    %624 = vmatpush1.msra.mxu0 0.0
    %625 = vmatprep.subr.mxu0 0.0
    %626 = vmatpush1.msra.mxu0 0.0
    %627 = vmatprep.subr.mxu0 0.0
    %628 = vmatpush1.msra.mxu0 0.0
    %629 = vmatprep.subr.mxu0 0.0
    %630 = vmatpush1.msra.mxu0 0.0
    %631 = vmatprep.subr.mxu0 0.0
    %632 = vmatpush1.msra.mxu0 0.0
    %633 = vmatprep.subr.mxu0 0.0
    %634 = vmatpush1.msra.mxu0 0.0
    %635 = vmatprep.subr.mxu0 0.0
    %636 = vmatpush1.msra.mxu0 0.0
    %637 = vmatprep.subr.mxu0 0.0
    %638 = vmatpush1.msra.mxu0 0.0
    %639 = vmatprep.subr.mxu0 0.0
    %640 = vmatpush1.msra.mxu0 0.0
    %641 = vmatprep.subr.mxu0 0.0
    %642 = vmatpush1.msra.mxu0 0.0
    %643 = vmatprep.subr.mxu0 0.0
    %644 = vmatpush1.msra.mxu0 0.0
    %645 = vmatprep.subr.mxu0 0.0
    %646 = vmatpush1.msra.mxu0 0.0
    %647 = vmatprep.subr.mxu0 0.0
    %648 = vmatpush1.msra.mxu0 0.0
    %649 = vmatprep.subr.mxu0 0.0
    %650 = vmatpush1.msra.mxu0 0.0
    %651 = vmatprep.subr.mxu0 0.0
    %652 = vmatpush1.msra.mxu0 0.0
    %653 = vmatprep.subr.mxu0 0.0
    %654 = vmatpush1.msra.mxu0 0.0
    %655 = vmatprep.subr.mxu0 0.0
    %656 = vmatpush1.msra.mxu0 0.0
    %657 = vmatprep.subr.mxu0 0.0
    %658 = vmatpush1.msra.mxu0 0.0
    %659 = vmatprep.subr.mxu0 0.0
    %660 = vmatpush1.msra.mxu0 0.0
    %661 = vmatprep.subr.mxu0 0.0
    %662 = vmatpush1.msra.mxu0 0.0
    %663 = vmatprep.subr.mxu0 0.0
    %664 = vmatpush1.msra.mxu0 0.0
    %665 = vmatprep.subr.mxu0 0.0
    %666 = vmatpush1.msra.mxu0 0.0
    %667 = vmatprep.mubr.f32.mxu0 0.0
    %668 = vmatmul.mubr.f32.gmra.mrb[0].mxu0 %v601
    %v669 = vpop.f32.mrb[0].mxu0
    %v670 = vadd.f32 0.0, %v669
    %v671 = vpop.f32.mrb[0].mxu0
    %672 = vdwg.mxu0
    %v673 = vadd.f32 %v163, %v670
    %v674 = vxor.u32 %v673, 2147483648
    %v675 = vmul.f32 %v674, 1.442695
    %v676 = vpow.pop %v675
    %v677 = vadd.f32 %v676, 1.0
    %v678 = vrcp.pop %v677
    %v679 = vmul.f32 1.0, %v678
    %v680 = vtanh.pop %v673
    %v681 = vmul.f32 %v679, %v589
    %683 = vrot.lane.b32.xlu0 %v680, 64
    %v684 = vpop.permute.xlu0 %683
    %v686 = vmul.f32 %v679, %v684
    %688 = vrot.lane.b32.xlu0 %v686, 32
    %v689 = vpop.permute.xlu0 %688
    %v691 = vadd.f32 %v681, %v689
    %v692 = vtanh.pop %v691
    %694 = vrot.lane.b32.xlu0 %v692, 64
    %v695 = vpop.permute.xlu0 %694
    %v697 = vmul.f32 %v679, %v695
    %699 = vrot.lane.b32.xlu0 %v697, 32
    %v700 = vpop.permute.xlu0 %699
    %702 = vst.msk [vmem:[#allocation2 + $0x20] sm:$0xff] %vm187, %v700
    %v703 = vsel %vm187, %v700, 0
    %705 = vmatprep.subr.mxu0 0.0
    %706 = vmatpush1.msra.mxu0 %v181
    %707 = vmatprep.subr.mxu0 0.0
    %708 = vmatpush1.msra.mxu0 %v182
    %709 = vmatprep.subr.mxu0 0.0
    %710 = vmatpush1.msra.mxu0 %v183
    %711 = vmatprep.subr.mxu0 0.0
    %712 = vmatpush1.msra.mxu0 %v184
    %713 = vmatprep.subr.mxu0 0.0
    %714 = vmatpush1.msra.mxu0 0.0
    %715 = vmatprep.subr.mxu0 0.0
    %716 = vmatpush1.msra.mxu0 0.0
    %717 = vmatprep.subr.mxu0 0.0
    %718 = vmatpush1.msra.mxu0 0.0
    %719 = vmatprep.subr.mxu0 0.0
    %720 = vmatpush1.msra.mxu0 0.0
    %721 = vmatprep.subr.mxu0 0.0
    %722 = vmatpush1.msra.mxu0 0.0
    %723 = vmatprep.subr.mxu0 0.0
    %724 = vmatpush1.msra.mxu0 0.0
    %725 = vmatprep.subr.mxu0 0.0
    %726 = vmatpush1.msra.mxu0 0.0
    %727 = vmatprep.subr.mxu0 0.0
    %728 = vmatpush1.msra.mxu0 0.0
    %729 = vmatprep.subr.mxu0 0.0
    %730 = vmatpush1.msra.mxu0 0.0
    %731 = vmatprep.subr.mxu0 0.0
    %732 = vmatpush1.msra.mxu0 0.0
    %733 = vmatprep.subr.mxu0 0.0
    %734 = vmatpush1.msra.mxu0 0.0
    %735 = vmatprep.subr.mxu0 0.0
    %736 = vmatpush1.msra.mxu0 0.0
    %737 = vmatprep.subr.mxu0 0.0
    %738 = vmatpush1.msra.mxu0 0.0
    %739 = vmatprep.subr.mxu0 0.0
    %740 = vmatpush1.msra.mxu0 0.0
    %741 = vmatprep.subr.mxu0 0.0
    %742 = vmatpush1.msra.mxu0 0.0
    %743 = vmatprep.subr.mxu0 0.0
    %744 = vmatpush1.msra.mxu0 0.0
    %745 = vmatprep.subr.mxu0 0.0
    %746 = vmatpush1.msra.mxu0 0.0
    %747 = vmatprep.subr.mxu0 0.0
    %748 = vmatpush1.msra.mxu0 0.0
    %749 = vmatprep.subr.mxu0 0.0
    %750 = vmatpush1.msra.mxu0 0.0
    %751 = vmatprep.subr.mxu0 0.0
    %752 = vmatpush1.msra.mxu0 0.0
    %753 = vmatprep.subr.mxu0 0.0
    %754 = vmatpush1.msra.mxu0 0.0
    %755 = vmatprep.subr.mxu0 0.0
    %756 = vmatpush1.msra.mxu0 0.0
    %757 = vmatprep.subr.mxu0 0.0
    %758 = vmatpush1.msra.mxu0 0.0
    %759 = vmatprep.subr.mxu0 0.0
    %760 = vmatpush1.msra.mxu0 0.0
    %761 = vmatprep.subr.mxu0 0.0
    %762 = vmatpush1.msra.mxu0 0.0
    %763 = vmatprep.subr.mxu0 0.0
    %764 = vmatpush1.msra.mxu0 0.0
    %765 = vmatprep.subr.mxu0 0.0
    %766 = vmatpush1.msra.mxu0 0.0
    %767 = vmatprep.subr.mxu0 0.0
    %768 = vmatpush1.msra.mxu0 0.0
    %769 = vmatprep.mubr.f32.mxu0 0.0
    %770 = vmatmul.mubr.f32.gmra.mrb[0].mxu0 %v703
    %v771 = vpop.f32.mrb[0].mxu0
    %v772 = vadd.f32 0.0, %v771
    %v773 = vpop.f32.mrb[0].mxu0
    %774 = vdwg.mxu0
    %v775 = vadd.f32 %v168, %v772
    %v776 = vxor.u32 %v775, 2147483648
    %v777 = vmul.f32 %v776, 1.442695
    %v778 = vpow.pop %v777
    %v779 = vadd.f32 %v778, 1.0
    %v780 = vrcp.pop %v779
    %v781 = vmul.f32 1.0, %v780
    %v782 = vtanh.pop %v775
    %v783 = vmul.f32 %v781, %v691
    %785 = vrot.lane.b32.xlu0 %v782, 64
    %v786 = vpop.permute.xlu0 %785
    %v788 = vmul.f32 %v781, %v786
    %790 = vrot.lane.b32.xlu0 %v788, 32
    %v791 = vpop.permute.xlu0 %790
    %v793 = vadd.f32 %v783, %v791
    %v794 = vtanh.pop %v793
    %796 = vrot.lane.b32.xlu0 %v794, 64
    %v797 = vpop.permute.xlu0 %796
    %v799 = vmul.f32 %v781, %v797
    %801 = vrot.lane.b32.xlu0 %v799, 32
    %v802 = vpop.permute.xlu0 %801
    %804 = vst.msk [vmem:[#allocation2 + $0x28] sm:$0xff] %vm187, %v802
    %v805 = vsel %vm187, %v802, 0
    %807 = vmatprep.subr.mxu0 0.0
    %808 = vmatpush1.msra.mxu0 %v181
    %809 = vmatprep.subr.mxu0 0.0
    %810 = vmatpush1.msra.mxu0 %v182
    %811 = vmatprep.subr.mxu0 0.0
    %812 = vmatpush1.msra.mxu0 %v183
    %813 = vmatprep.subr.mxu0 0.0
    %814 = vmatpush1.msra.mxu0 %v184
    %815 = vmatprep.subr.mxu0 0.0
    %816 = vmatpush1.msra.mxu0 0.0
    %817 = vmatprep.subr.mxu0 0.0
    %818 = vmatpush1.msra.mxu0 0.0
    %819 = vmatprep.subr.mxu0 0.0
    %820 = vmatpush1.msra.mxu0 0.0
    %821 = vmatprep.subr.mxu0 0.0
    %822 = vmatpush1.msra.mxu0 0.0
    %823 = vmatprep.subr.mxu0 0.0
    %824 = vmatpush1.msra.mxu0 0.0
    %825 = vmatprep.subr.mxu0 0.0
    %826 = vmatpush1.msra.mxu0 0.0
    %827 = vmatprep.subr.mxu0 0.0
    %828 = vmatpush1.msra.mxu0 0.0
    %829 = vmatprep.subr.mxu0 0.0
    %830 = vmatpush1.msra.mxu0 0.0
    %831 = vmatprep.subr.mxu0 0.0
    %832 = vmatpush1.msra.mxu0 0.0
    %833 = vmatprep.subr.mxu0 0.0
    %834 = vmatpush1.msra.mxu0 0.0
    %835 = vmatprep.subr.mxu0 0.0
    %836 = vmatpush1.msra.mxu0 0.0
    %837 = vmatprep.subr.mxu0 0.0
    %838 = vmatpush1.msra.mxu0 0.0
    %839 = vmatprep.subr.mxu0 0.0
    %840 = vmatpush1.msra.mxu0 0.0
    %841 = vmatprep.subr.mxu0 0.0
    %842 = vmatpush1.msra.mxu0 0.0
    %843 = vmatprep.subr.mxu0 0.0
    %844 = vmatpush1.msra.mxu0 0.0
    %845 = vmatprep.subr.mxu0 0.0
    %846 = vmatpush1.msra.mxu0 0.0
    %847 = vmatprep.subr.mxu0 0.0
    %848 = vmatpush1.msra.mxu0 0.0
    %849 = vmatprep.subr.mxu0 0.0
    %850 = vmatpush1.msra.mxu0 0.0
    %851 = vmatprep.subr.mxu0 0.0
    %852 = vmatpush1.msra.mxu0 0.0
    %853 = vmatprep.subr.mxu0 0.0
    %854 = vmatpush1.msra.mxu0 0.0
    %855 = vmatprep.subr.mxu0 0.0
    %856 = vmatpush1.msra.mxu0 0.0
    %857 = vmatprep.subr.mxu0 0.0
    %858 = vmatpush1.msra.mxu0 0.0
    %859 = vmatprep.subr.mxu0 0.0
    %860 = vmatpush1.msra.mxu0 0.0
    %861 = vmatprep.subr.mxu0 0.0
    %862 = vmatpush1.msra.mxu0 0.0
    %863 = vmatprep.subr.mxu0 0.0
    %864 = vmatpush1.msra.mxu0 0.0
    %865 = vmatprep.subr.mxu0 0.0
    %866 = vmatpush1.msra.mxu0 0.0
    %867 = vmatprep.subr.mxu0 0.0
    %868 = vmatpush1.msra.mxu0 0.0
    %869 = vmatprep.subr.mxu0 0.0
    %870 = vmatpush1.msra.mxu0 0.0
    %871 = vmatprep.mubr.f32.mxu0 0.0
    %872 = vmatmul.mubr.f32.gmra.mrb[0].mxu0 %v805
    %v873 = vpop.f32.mrb[0].mxu0
    %v874 = vadd.f32 0.0, %v873
    %v875 = vpop.f32.mrb[0].mxu0
    %876 = vdwg.mxu0
    %v877 = vadd.f32 %v173, %v874
    %v878 = vxor.u32 %v877, 2147483648
    %v879 = vmul.f32 %v878, 1.442695
    %v880 = vpow.pop %v879
    %v881 = vadd.f32 %v880, 1.0
    %v882 = vrcp.pop %v881
    %v883 = vmul.f32 1.0, %v882
    %v884 = vtanh.pop %v877
    %v885 = vmul.f32 %v883, %v793
    %887 = vrot.lane.b32.xlu0 %v884, 64
    %v888 = vpop.permute.xlu0 %887
    %v890 = vmul.f32 %v883, %v888
    %892 = vrot.lane.b32.xlu0 %v890, 32
    %v893 = vpop.permute.xlu0 %892
    %v895 = vadd.f32 %v885, %v893
    %v896 = vtanh.pop %v895
    %898 = vrot.lane.b32.xlu0 %v896, 64
    %v899 = vpop.permute.xlu0 %898
    %v901 = vmul.f32 %v883, %v899
    %903 = vrot.lane.b32.xlu0 %v901, 32
    %v904 = vpop.permute.xlu0 %903
    %906 = vst.msk [vmem:[#allocation2 + $0x30] sm:$0xff] %vm187, %v904
    %v907 = vsel %vm187, %v904, 0
    %909 = vmatprep.subr.mxu0 0.0
    %910 = vmatpush1.msra.mxu0 %v181
    %911 = vmatprep.subr.mxu0 0.0
    %912 = vmatpush1.msra.mxu0 %v182
    %913 = vmatprep.subr.mxu0 0.0
    %914 = vmatpush1.msra.mxu0 %v183
    %915 = vmatprep.subr.mxu0 0.0
    %916 = vmatpush1.msra.mxu0 %v184
    %917 = vmatprep.subr.mxu0 0.0
    %918 = vmatpush1.msra.mxu0 0.0
    %919 = vmatprep.subr.mxu0 0.0
    %920 = vmatpush1.msra.mxu0 0.0
    %921 = vmatprep.subr.mxu0 0.0
    %922 = vmatpush1.msra.mxu0 0.0
    %923 = vmatprep.subr.mxu0 0.0
    %924 = vmatpush1.msra.mxu0 0.0
    %925 = vmatprep.subr.mxu0 0.0
    %926 = vmatpush1.msra.mxu0 0.0
    %927 = vmatprep.subr.mxu0 0.0
    %928 = vmatpush1.msra.mxu0 0.0
    %929 = vmatprep.subr.mxu0 0.0
    %930 = vmatpush1.msra.mxu0 0.0
    %931 = vmatprep.subr.mxu0 0.0
    %932 = vmatpush1.msra.mxu0 0.0
    %933 = vmatprep.subr.mxu0 0.0
    %934 = vmatpush1.msra.mxu0 0.0
    %935 = vmatprep.subr.mxu0 0.0
    %936 = vmatpush1.msra.mxu0 0.0
    %937 = vmatprep.subr.mxu0 0.0
    %938 = vmatpush1.msra.mxu0 0.0
    %939 = vmatprep.subr.mxu0 0.0
    %940 = vmatpush1.msra.mxu0 0.0
    %941 = vmatprep.subr.mxu0 0.0
    %942 = vmatpush1.msra.mxu0 0.0
    %943 = vmatprep.subr.mxu0 0.0
    %944 = vmatpush1.msra.mxu0 0.0
    %945 = vmatprep.subr.mxu0 0.0
    %946 = vmatpush1.msra.mxu0 0.0
    %947 = vmatprep.subr.mxu0 0.0
    %948 = vmatpush1.msra.mxu0 0.0
    %949 = vmatprep.subr.mxu0 0.0
    %950 = vmatpush1.msra.mxu0 0.0
    %951 = vmatprep.subr.mxu0 0.0
    %952 = vmatpush1.msra.mxu0 0.0
    %953 = vmatprep.subr.mxu0 0.0
    %954 = vmatpush1.msra.mxu0 0.0
    %955 = vmatprep.subr.mxu0 0.0
    %956 = vmatpush1.msra.mxu0 0.0
    %957 = vmatprep.subr.mxu0 0.0
    %958 = vmatpush1.msra.mxu0 0.0
    %959 = vmatprep.subr.mxu0 0.0
    %960 = vmatpush1.msra.mxu0 0.0
    %961 = vmatprep.subr.mxu0 0.0
    %962 = vmatpush1.msra.mxu0 0.0
    %963 = vmatprep.subr.mxu0 0.0
    %964 = vmatpush1.msra.mxu0 0.0
    %965 = vmatprep.subr.mxu0 0.0
    %966 = vmatpush1.msra.mxu0 0.0
    %967 = vmatprep.subr.mxu0 0.0
    %968 = vmatpush1.msra.mxu0 0.0
    %969 = vmatprep.subr.mxu0 0.0
    %970 = vmatpush1.msra.mxu0 0.0
    %971 = vmatprep.subr.mxu0 0.0
    %972 = vmatpush1.msra.mxu0 0.0
    %973 = vmatprep.mubr.f32.mxu0 0.0
    %974 = vmatmul.mubr.f32.gmra.mrb[0].mxu0 %v907
    %v975 = vpop.f32.mrb[0].mxu0
    %v976 = vadd.f32 0.0, %v975
    %v977 = vpop.f32.mrb[0].mxu0
    %978 = vdwg.mxu0
    %v979 = vadd.f32 %v178, %v976
    %v980 = vxor.u32 %v979, 2147483648
    %v981 = vmul.f32 %v980, 1.442695
    %v982 = vpow.pop %v981
    %v983 = vadd.f32 %v982, 1.0
    %v984 = vrcp.pop %v983
    %v985 = vmul.f32 1.0, %v984
    %v986 = vtanh.pop %v979
    %v987 = vmul.f32 %v985, %v895
    %989 = vrot.lane.b32.xlu0 %v986, 64
    %v990 = vpop.permute.xlu0 %989
    %v992 = vmul.f32 %v985, %v990
    %994 = vrot.lane.b32.xlu0 %v992, 32
    %v995 = vpop.permute.xlu0 %994
    %v997 = vadd.f32 %v987, %v995
    %v998 = vtanh.pop %v997
    %1000 = vrot.lane.b32.xlu0 %v998, 64
    %v1001 = vpop.permute.xlu0 %1000
    %v1003 = vmul.f32 %v985, %v1001
    %1005 = vrot.lane.b32.xlu0 %v1003, 32
    %v1006 = vpop.permute.xlu0 %1005
    %1008 = vst.msk [vmem:[#allocation2 + $0x38] sm:$0xff] %vm187, %v1006
    %1009 = vst.msk [vmem:[#allocation3] sm:$0xff] %vm187, %v1006
    %1011 = vrot.lane.b32.xlu0 %v997, 96
    %v1012 = vpop.permute.xlu0 %1011
    %1014 = vst.msk [vmem:[#allocation5] sm:$0xff] %vm187, %v1012
    %v1015 = vld [vmem:[#allocation2] ss:$8 sm:$0xf]
    %v1016 = vld [vmem:[#allocation2] ss:$8 sm:$0xf0]
    %v1017 = vor.u32 %v1015, %v1016
    %v1018 = vld [vmem:[%s4] sm:$0xff]
    %v1019 = vld [vmem:[%s4 + $0x8] sm:$0xff]
    %v1020 = vld [vmem:[%s4 + $0x10] sm:$0xff]
    %v1021 = vld [vmem:[%s4 + $0x18] sm:$0xff]
    %s1022 = scalar_lea.vmem [#allocation2], 1
    %v1023 = vld [vmem:[%s1022] ss:$8 sm:$0xf]
    %v1024 = vld [vmem:[%s1022] ss:$8 sm:$0xf0]
    %v1025 = vor.u32 %v1023, %v1024
    %v1026 = vld [vmem:[%s4 + $0x20] sm:$0xff]
    %v1027 = vld [vmem:[%s4 + $0x28] sm:$0xff]
    %v1028 = vld [vmem:[%s4 + $0x30] sm:$0xff]
    %v1029 = vld [vmem:[%s4 + $0x38] sm:$0xff]
    %v1031 = vsel %vm187, %v1025, 0
    %1033 = vmatprep.subr.mxu0 0.0
    %1034 = vmatpush1.msra.mxu0 %v1026
    %1035 = vmatprep.subr.mxu0 0.0
    %1036 = vmatpush1.msra.mxu0 %v1027
    %1037 = vmatprep.subr.mxu0 0.0
    %1038 = vmatpush1.msra.mxu0 %v1028
    %1039 = vmatprep.subr.mxu0 0.0
    %1040 = vmatpush1.msra.mxu0 %v1029
    %1041 = vmatprep.subr.mxu0 0.0
    %1042 = vmatpush1.msra.mxu0 0.0
    %1043 = vmatprep.subr.mxu0 0.0
    %1044 = vmatpush1.msra.mxu0 0.0
    %1045 = vmatprep.subr.mxu0 0.0
    %1046 = vmatpush1.msra.mxu0 0.0
    %1047 = vmatprep.subr.mxu0 0.0
    %1048 = vmatpush1.msra.mxu0 0.0
    %1049 = vmatprep.subr.mxu0 0.0
    %1050 = vmatpush1.msra.mxu0 0.0
    %1051 = vmatprep.subr.mxu0 0.0
    %1052 = vmatpush1.msra.mxu0 0.0
    %1053 = vmatprep.subr.mxu0 0.0
    %1054 = vmatpush1.msra.mxu0 0.0
    %1055 = vmatprep.subr.mxu0 0.0
    %1056 = vmatpush1.msra.mxu0 0.0
    %1057 = vmatprep.subr.mxu0 0.0
    %1058 = vmatpush1.msra.mxu0 0.0
    %1059 = vmatprep.subr.mxu0 0.0
    %1060 = vmatpush1.msra.mxu0 0.0
    %1061 = vmatprep.subr.mxu0 0.0
    %1062 = vmatpush1.msra.mxu0 0.0
    %1063 = vmatprep.subr.mxu0 0.0
    %1064 = vmatpush1.msra.mxu0 0.0
    %1065 = vmatprep.subr.mxu0 0.0
    %1066 = vmatpush1.msra.mxu0 0.0
    %1067 = vmatprep.subr.mxu0 0.0
    %1068 = vmatpush1.msra.mxu0 0.0
    %1069 = vmatprep.subr.mxu0 0.0
    %1070 = vmatpush1.msra.mxu0 0.0
    %1071 = vmatprep.subr.mxu0 0.0
    %1072 = vmatpush1.msra.mxu0 0.0
    %1073 = vmatprep.subr.mxu0 0.0
    %1074 = vmatpush1.msra.mxu0 0.0
    %1075 = vmatprep.subr.mxu0 0.0
    %1076 = vmatpush1.msra.mxu0 0.0
    %1077 = vmatprep.subr.mxu0 0.0
    %1078 = vmatpush1.msra.mxu0 0.0
    %1079 = vmatprep.subr.mxu0 0.0
    %1080 = vmatpush1.msra.mxu0 0.0
    %1081 = vmatprep.subr.mxu0 0.0
    %1082 = vmatpush1.msra.mxu0 0.0
    %1083 = vmatprep.subr.mxu0 0.0
    %1084 = vmatpush1.msra.mxu0 0.0
    %1085 = vmatprep.subr.mxu0 0.0
    %1086 = vmatpush1.msra.mxu0 0.0
    %1087 = vmatprep.subr.mxu0 0.0
    %1088 = vmatpush1.msra.mxu0 0.0
    %1089 = vmatprep.subr.mxu0 0.0
    %1090 = vmatpush1.msra.mxu0 0.0
    %1091 = vmatprep.subr.mxu0 0.0
    %1092 = vmatpush1.msra.mxu0 0.0
    %1093 = vmatprep.subr.mxu0 0.0
    %1094 = vmatpush1.msra.mxu0 0.0
    %1095 = vmatprep.subr.mxu0 0.0
    %1096 = vmatpush1.msra.mxu0 0.0
    %1097 = vmatprep.mubr.f32.mxu0 0.0
    %1098 = vmatmul.mubr.f32.gmra.mrb[0].mxu0 %v1031
    %v1099 = vpop.f32.mrb[0].mxu0
    %v1100 = vadd.f32 0.0, %v1099
    %v1101 = vpop.f32.mrb[0].mxu0
    %1102 = vdwg.mxu0
    %v1104 = vsel %vm187, %v1017, 0
    %1106 = vmatprep.subr.mxu0 0.0
    %1107 = vmatpush1.msra.mxu0 %v1018
    %1108 = vmatprep.subr.mxu0 0.0
    %1109 = vmatpush1.msra.mxu0 %v1019
    %1110 = vmatprep.subr.mxu0 0.0
    %1111 = vmatpush1.msra.mxu0 %v1020
    %1112 = vmatprep.subr.mxu0 0.0
    %1113 = vmatpush1.msra.mxu0 %v1021
    %1114 = vmatprep.subr.mxu0 0.0
    %1115 = vmatpush1.msra.mxu0 0.0
    %1116 = vmatprep.subr.mxu0 0.0
    %1117 = vmatpush1.msra.mxu0 0.0
    %1118 = vmatprep.subr.mxu0 0.0
    %1119 = vmatpush1.msra.mxu0 0.0
    %1120 = vmatprep.subr.mxu0 0.0
    %1121 = vmatpush1.msra.mxu0 0.0
    %1122 = vmatprep.subr.mxu0 0.0
    %1123 = vmatpush1.msra.mxu0 0.0
    %1124 = vmatprep.subr.mxu0 0.0
    %1125 = vmatpush1.msra.mxu0 0.0
    %1126 = vmatprep.subr.mxu0 0.0
    %1127 = vmatpush1.msra.mxu0 0.0
    %1128 = vmatprep.subr.mxu0 0.0
    %1129 = vmatpush1.msra.mxu0 0.0
    %1130 = vmatprep.subr.mxu0 0.0
    %1131 = vmatpush1.msra.mxu0 0.0
    %1132 = vmatprep.subr.mxu0 0.0
    %1133 = vmatpush1.msra.mxu0 0.0
    %1134 = vmatprep.subr.mxu0 0.0
    %1135 = vmatpush1.msra.mxu0 0.0
    %1136 = vmatprep.subr.mxu0 0.0
    %1137 = vmatpush1.msra.mxu0 0.0
    %1138 = vmatprep.subr.mxu0 0.0
    %1139 = vmatpush1.msra.mxu0 0.0
    %1140 = vmatprep.subr.mxu0 0.0
    %1141 = vmatpush1.msra.mxu0 0.0
    %1142 = vmatprep.subr.mxu0 0.0
    %1143 = vmatpush1.msra.mxu0 0.0
    %1144 = vmatprep.subr.mxu0 0.0
    %1145 = vmatpush1.msra.mxu0 0.0
    %1146 = vmatprep.subr.mxu0 0.0
    %1147 = vmatpush1.msra.mxu0 0.0
    %1148 = vmatprep.subr.mxu0 0.0
    %1149 = vmatpush1.msra.mxu0 0.0
    %1150 = vmatprep.subr.mxu0 0.0
    %1151 = vmatpush1.msra.mxu0 0.0
    %1152 = vmatprep.subr.mxu0 0.0
    %1153 = vmatpush1.msra.mxu0 0.0
    %1154 = vmatprep.subr.mxu0 0.0
    %1155 = vmatpush1.msra.mxu0 0.0
    %1156 = vmatprep.subr.mxu0 0.0
    %1157 = vmatpush1.msra.mxu0 0.0
    %1158 = vmatprep.subr.mxu0 0.0
    %1159 = vmatpush1.msra.mxu0 0.0
    %1160 = vmatprep.subr.mxu0 0.0
    %1161 = vmatpush1.msra.mxu0 0.0
    %1162 = vmatprep.subr.mxu0 0.0
    %1163 = vmatpush1.msra.mxu0 0.0
    %1164 = vmatprep.subr.mxu0 0.0
    %1165 = vmatpush1.msra.mxu0 0.0
    %1166 = vmatprep.subr.mxu0 0.0
    %1167 = vmatpush1.msra.mxu0 0.0
    %1168 = vmatprep.subr.mxu0 0.0
    %1169 = vmatpush1.msra.mxu0 0.0
    %1170 = vmatprep.mubr.f32.mxu0 0.0
    %1171 = vmatmul.mubr.f32.gmra.mrb[0].mxu0 %v1104
    %v1172 = vpop.f32.mrb[0].mxu0
    %v1173 = vadd.f32 %v1100, %v1172
    %v1174 = vpop.f32.mrb[0].mxu0
    %1175 = vdwg.mxu0
    %s1176 = scalar_lea.vmem [#allocation2], 2
    %v1177 = vld [vmem:[%s1176] ss:$8 sm:$0xf]
    %v1178 = vld [vmem:[%s1176] ss:$8 sm:$0xf0]
    %v1179 = vor.u32 %v1177, %v1178
    %v1180 = vld [vmem:[%s4 + $0x40] sm:$0xff]
    %v1181 = vld [vmem:[%s4 + $0x48] sm:$0xff]
    %v1182 = vld [vmem:[%s4 + $0x50] sm:$0xff]
    %v1183 = vld [vmem:[%s4 + $0x58] sm:$0xff]
    %v1185 = vsel %vm187, %v1179, 0
    %1187 = vmatprep.subr.mxu0 0.0
    %1188 = vmatpush1.msra.mxu0 %v1180
    %1189 = vmatprep.subr.mxu0 0.0
    %1190 = vmatpush1.msra.mxu0 %v1181
    %1191 = vmatprep.subr.mxu0 0.0
    %1192 = vmatpush1.msra.mxu0 %v1182
    %1193 = vmatprep.subr.mxu0 0.0
    %1194 = vmatpush1.msra.mxu0 %v1183
    %1195 = vmatprep.subr.mxu0 0.0
    %1196 = vmatpush1.msra.mxu0 0.0
    %1197 = vmatprep.subr.mxu0 0.0
    %1198 = vmatpush1.msra.mxu0 0.0
    %1199 = vmatprep.subr.mxu0 0.0
    %1200 = vmatpush1.msra.mxu0 0.0
    %1201 = vmatprep.subr.mxu0 0.0
    %1202 = vmatpush1.msra.mxu0 0.0
    %1203 = vmatprep.subr.mxu0 0.0
    %1204 = vmatpush1.msra.mxu0 0.0
    %1205 = vmatprep.subr.mxu0 0.0
    %1206 = vmatpush1.msra.mxu0 0.0
    %1207 = vmatprep.subr.mxu0 0.0
    %1208 = vmatpush1.msra.mxu0 0.0
    %1209 = vmatprep.subr.mxu0 0.0
    %1210 = vmatpush1.msra.mxu0 0.0
    %1211 = vmatprep.subr.mxu0 0.0
    %1212 = vmatpush1.msra.mxu0 0.0
    %1213 = vmatprep.subr.mxu0 0.0
    %1214 = vmatpush1.msra.mxu0 0.0
    %1215 = vmatprep.subr.mxu0 0.0
    %1216 = vmatpush1.msra.mxu0 0.0
    %1217 = vmatprep.subr.mxu0 0.0
    %1218 = vmatpush1.msra.mxu0 0.0
    %1219 = vmatprep.subr.mxu0 0.0
    %1220 = vmatpush1.msra.mxu0 0.0
    %1221 = vmatprep.subr.mxu0 0.0
    %1222 = vmatpush1.msra.mxu0 0.0
    %1223 = vmatprep.subr.mxu0 0.0
    %1224 = vmatpush1.msra.mxu0 0.0
    %1225 = vmatprep.subr.mxu0 0.0
    %1226 = vmatpush1.msra.mxu0 0.0
    %1227 = vmatprep.subr.mxu0 0.0
    %1228 = vmatpush1.msra.mxu0 0.0
    %1229 = vmatprep.subr.mxu0 0.0
    %1230 = vmatpush1.msra.mxu0 0.0
    %1231 = vmatprep.subr.mxu0 0.0
    %1232 = vmatpush1.msra.mxu0 0.0
    %1233 = vmatprep.subr.mxu0 0.0
    %1234 = vmatpush1.msra.mxu0 0.0
    %1235 = vmatprep.subr.mxu0 0.0
    %1236 = vmatpush1.msra.mxu0 0.0
    %1237 = vmatprep.subr.mxu0 0.0
    %1238 = vmatpush1.msra.mxu0 0.0
    %1239 = vmatprep.subr.mxu0 0.0
    %1240 = vmatpush1.msra.mxu0 0.0
    %1241 = vmatprep.subr.mxu0 0.0
    %1242 = vmatpush1.msra.mxu0 0.0
    %1243 = vmatprep.subr.mxu0 0.0
    %1244 = vmatpush1.msra.mxu0 0.0
    %1245 = vmatprep.subr.mxu0 0.0
    %1246 = vmatpush1.msra.mxu0 0.0
    %1247 = vmatprep.subr.mxu0 0.0
    %1248 = vmatpush1.msra.mxu0 0.0
    %1249 = vmatprep.subr.mxu0 0.0
    %1250 = vmatpush1.msra.mxu0 0.0
    %1251 = vmatprep.mubr.f32.mxu0 0.0
    %1252 = vmatmul.mubr.f32.gmra.mrb[0].mxu0 %v1185
    %v1253 = vpop.f32.mrb[0].mxu0
    %v1254 = vadd.f32 0.0, %v1253
    %v1255 = vpop.f32.mrb[0].mxu0
    %1256 = vdwg.mxu0
    %v1257 = vadd.f32 %v1173, %v1254
    %s1258 = scalar_lea.vmem [#allocation2], 3
    %v1259 = vld [vmem:[%s1258] ss:$8 sm:$0xf]
    %v1260 = vld [vmem:[%s1258] ss:$8 sm:$0xf0]
    %v1261 = vor.u32 %v1259, %v1260
    %v1262 = vld [vmem:[%s4 + $0x60] sm:$0xff]
    %v1263 = vld [vmem:[%s4 + $0x68] sm:$0xff]
    %v1264 = vld [vmem:[%s4 + $0x70] sm:$0xff]
    %v1265 = vld [vmem:[%s4 + $0x78] sm:$0xff]
    %v1267 = vsel %vm187, %v1261, 0
    %1269 = vmatprep.subr.mxu0 0.0
    %1270 = vmatpush1.msra.mxu0 %v1262
    %1271 = vmatprep.subr.mxu0 0.0
    %1272 = vmatpush1.msra.mxu0 %v1263
    %1273 = vmatprep.subr.mxu0 0.0
    %1274 = vmatpush1.msra.mxu0 %v1264
    %1275 = vmatprep.subr.mxu0 0.0
    %1276 = vmatpush1.msra.mxu0 %v1265
    %1277 = vmatprep.subr.mxu0 0.0
    %1278 = vmatpush1.msra.mxu0 0.0
    %1279 = vmatprep.subr.mxu0 0.0
    %1280 = vmatpush1.msra.mxu0 0.0
    %1281 = vmatprep.subr.mxu0 0.0
    %1282 = vmatpush1.msra.mxu0 0.0
    %1283 = vmatprep.subr.mxu0 0.0
    %1284 = vmatpush1.msra.mxu0 0.0
    %1285 = vmatprep.subr.mxu0 0.0
    %1286 = vmatpush1.msra.mxu0 0.0
    %1287 = vmatprep.subr.mxu0 0.0
    %1288 = vmatpush1.msra.mxu0 0.0
    %1289 = vmatprep.subr.mxu0 0.0
    %1290 = vmatpush1.msra.mxu0 0.0
    %1291 = vmatprep.subr.mxu0 0.0
    %1292 = vmatpush1.msra.mxu0 0.0
    %1293 = vmatprep.subr.mxu0 0.0
    %1294 = vmatpush1.msra.mxu0 0.0
    %1295 = vmatprep.subr.mxu0 0.0
    %1296 = vmatpush1.msra.mxu0 0.0
    %1297 = vmatprep.subr.mxu0 0.0
    %1298 = vmatpush1.msra.mxu0 0.0
    %1299 = vmatprep.subr.mxu0 0.0
    %1300 = vmatpush1.msra.mxu0 0.0
    %1301 = vmatprep.subr.mxu0 0.0
    %1302 = vmatpush1.msra.mxu0 0.0
    %1303 = vmatprep.subr.mxu0 0.0
    %1304 = vmatpush1.msra.mxu0 0.0
    %1305 = vmatprep.subr.mxu0 0.0
    %1306 = vmatpush1.msra.mxu0 0.0
    %1307 = vmatprep.subr.mxu0 0.0
    %1308 = vmatpush1.msra.mxu0 0.0
    %1309 = vmatprep.subr.mxu0 0.0
    %1310 = vmatpush1.msra.mxu0 0.0
    %1311 = vmatprep.subr.mxu0 0.0
    %1312 = vmatpush1.msra.mxu0 0.0
    %1313 = vmatprep.subr.mxu0 0.0
    %1314 = vmatpush1.msra.mxu0 0.0
    %1315 = vmatprep.subr.mxu0 0.0
    %1316 = vmatpush1.msra.mxu0 0.0
    %1317 = vmatprep.subr.mxu0 0.0
    %1318 = vmatpush1.msra.mxu0 0.0
    %1319 = vmatprep.subr.mxu0 0.0
    %1320 = vmatpush1.msra.mxu0 0.0
    %1321 = vmatprep.subr.mxu0 0.0
    %1322 = vmatpush1.msra.mxu0 0.0
    %1323 = vmatprep.subr.mxu0 0.0
    %1324 = vmatpush1.msra.mxu0 0.0
    %1325 = vmatprep.subr.mxu0 0.0
    %1326 = vmatpush1.msra.mxu0 0.0
    %1327 = vmatprep.subr.mxu0 0.0
    %1328 = vmatpush1.msra.mxu0 0.0
    %1329 = vmatprep.subr.mxu0 0.0
    %1330 = vmatpush1.msra.mxu0 0.0
    %1331 = vmatprep.subr.mxu0 0.0
    %1332 = vmatpush1.msra.mxu0 0.0
    %1333 = vmatprep.mubr.f32.mxu0 0.0
    %1334 = vmatmul.mubr.f32.gmra.mrb[0].mxu0 %v1267
    %v1335 = vpop.f32.mrb[0].mxu0
    %v1336 = vadd.f32 0.0, %v1335
    %v1337 = vpop.f32.mrb[0].mxu0
    %1338 = vdwg.mxu0
    %v1339 = vadd.f32 %v1257, %v1336
    %s1340 = scalar_lea.vmem [#allocation2], 4
    %v1341 = vld [vmem:[%s1340] ss:$8 sm:$0xf]
    %v1342 = vld [vmem:[%s1340] ss:$8 sm:$0xf0]
    %v1343 = vor.u32 %v1341, %v1342
    %v1344 = vld [vmem:[%s4 + $0x80] sm:$0xff]
    %v1345 = vld [vmem:[%s4 + $0x88] sm:$0xff]
    %v1346 = vld [vmem:[%s4 + $0x90] sm:$0xff]
    %v1347 = vld [vmem:[%s4 + $0x98] sm:$0xff]
    %v1349 = vsel %vm187, %v1343, 0
    %1351 = vmatprep.subr.mxu0 0.0
    %1352 = vmatpush1.msra.mxu0 %v1344
    %1353 = vmatprep.subr.mxu0 0.0
    %1354 = vmatpush1.msra.mxu0 %v1345
    %1355 = vmatprep.subr.mxu0 0.0
    %1356 = vmatpush1.msra.mxu0 %v1346
    %1357 = vmatprep.subr.mxu0 0.0
    %1358 = vmatpush1.msra.mxu0 %v1347
    %1359 = vmatprep.subr.mxu0 0.0
    %1360 = vmatpush1.msra.mxu0 0.0
    %1361 = vmatprep.subr.mxu0 0.0
    %1362 = vmatpush1.msra.mxu0 0.0
    %1363 = vmatprep.subr.mxu0 0.0
    %1364 = vmatpush1.msra.mxu0 0.0
    %1365 = vmatprep.subr.mxu0 0.0
    %1366 = vmatpush1.msra.mxu0 0.0
    %1367 = vmatprep.subr.mxu0 0.0
    %1368 = vmatpush1.msra.mxu0 0.0
    %1369 = vmatprep.subr.mxu0 0.0
    %1370 = vmatpush1.msra.mxu0 0.0
    %1371 = vmatprep.subr.mxu0 0.0
    %1372 = vmatpush1.msra.mxu0 0.0
    %1373 = vmatprep.subr.mxu0 0.0
    %1374 = vmatpush1.msra.mxu0 0.0
    %1375 = vmatprep.subr.mxu0 0.0
    %1376 = vmatpush1.msra.mxu0 0.0
    %1377 = vmatprep.subr.mxu0 0.0
    %1378 = vmatpush1.msra.mxu0 0.0
    %1379 = vmatprep.subr.mxu0 0.0
    %1380 = vmatpush1.msra.mxu0 0.0
    %1381 = vmatprep.subr.mxu0 0.0
    %1382 = vmatpush1.msra.mxu0 0.0
    %1383 = vmatprep.subr.mxu0 0.0
    %1384 = vmatpush1.msra.mxu0 0.0
    %1385 = vmatprep.subr.mxu0 0.0
    %1386 = vmatpush1.msra.mxu0 0.0
    %1387 = vmatprep.subr.mxu0 0.0
    %1388 = vmatpush1.msra.mxu0 0.0
    %1389 = vmatprep.subr.mxu0 0.0
    %1390 = vmatpush1.msra.mxu0 0.0
    %1391 = vmatprep.subr.mxu0 0.0
    %1392 = vmatpush1.msra.mxu0 0.0
    %1393 = vmatprep.subr.mxu0 0.0
    %1394 = vmatpush1.msra.mxu0 0.0
    %1395 = vmatprep.subr.mxu0 0.0
    %1396 = vmatpush1.msra.mxu0 0.0
    %1397 = vmatprep.subr.mxu0 0.0
    %1398 = vmatpush1.msra.mxu0 0.0
    %1399 = vmatprep.subr.mxu0 0.0
    %1400 = vmatpush1.msra.mxu0 0.0
    %1401 = vmatprep.subr.mxu0 0.0
    %1402 = vmatpush1.msra.mxu0 0.0
    %1403 = vmatprep.subr.mxu0 0.0
    %1404 = vmatpush1.msra.mxu0 0.0
    %1405 = vmatprep.subr.mxu0 0.0
    %1406 = vmatpush1.msra.mxu0 0.0
    %1407 = vmatprep.subr.mxu0 0.0
    %1408 = vmatpush1.msra.mxu0 0.0
    %1409 = vmatprep.subr.mxu0 0.0
    %1410 = vmatpush1.msra.mxu0 0.0
    %1411 = vmatprep.subr.mxu0 0.0
    %1412 = vmatpush1.msra.mxu0 0.0
    %1413 = vmatprep.subr.mxu0 0.0
    %1414 = vmatpush1.msra.mxu0 0.0
    %1415 = vmatprep.mubr.f32.mxu0 0.0
    %1416 = vmatmul.mubr.f32.gmra.mrb[0].mxu0 %v1349
    %v1417 = vpop.f32.mrb[0].mxu0
    %v1418 = vadd.f32 0.0, %v1417
    %v1419 = vpop.f32.mrb[0].mxu0
    %1420 = vdwg.mxu0
    %v1421 = vadd.f32 %v1339, %v1418
    %s1422 = scalar_lea.vmem [#allocation2], 5
    %v1423 = vld [vmem:[%s1422] ss:$8 sm:$0xf]
    %v1424 = vld [vmem:[%s1422] ss:$8 sm:$0xf0]
    %v1425 = vor.u32 %v1423, %v1424
    %v1426 = vld [vmem:[%s4 + $0xa0] sm:$0xff]
    %v1427 = vld [vmem:[%s4 + $0xa8] sm:$0xff]
    %v1428 = vld [vmem:[%s4 + $0xb0] sm:$0xff]
    %v1429 = vld [vmem:[%s4 + $0xb8] sm:$0xff]
    %v1431 = vsel %vm187, %v1425, 0
    %1433 = vmatprep.subr.mxu0 0.0
    %1434 = vmatpush1.msra.mxu0 %v1426
    %1435 = vmatprep.subr.mxu0 0.0
    %1436 = vmatpush1.msra.mxu0 %v1427
    %1437 = vmatprep.subr.mxu0 0.0
    %1438 = vmatpush1.msra.mxu0 %v1428
    %1439 = vmatprep.subr.mxu0 0.0
    %1440 = vmatpush1.msra.mxu0 %v1429
    %1441 = vmatprep.subr.mxu0 0.0
    %1442 = vmatpush1.msra.mxu0 0.0
    %1443 = vmatprep.subr.mxu0 0.0
    %1444 = vmatpush1.msra.mxu0 0.0
    %1445 = vmatprep.subr.mxu0 0.0
    %1446 = vmatpush1.msra.mxu0 0.0
    %1447 = vmatprep.subr.mxu0 0.0
    %1448 = vmatpush1.msra.mxu0 0.0
    %1449 = vmatprep.subr.mxu0 0.0
    %1450 = vmatpush1.msra.mxu0 0.0
    %1451 = vmatprep.subr.mxu0 0.0
    %1452 = vmatpush1.msra.mxu0 0.0
    %1453 = vmatprep.subr.mxu0 0.0
    %1454 = vmatpush1.msra.mxu0 0.0
    %1455 = vmatprep.subr.mxu0 0.0
    %1456 = vmatpush1.msra.mxu0 0.0
    %1457 = vmatprep.subr.mxu0 0.0
    %1458 = vmatpush1.msra.mxu0 0.0
    %1459 = vmatprep.subr.mxu0 0.0
    %1460 = vmatpush1.msra.mxu0 0.0
    %1461 = vmatprep.subr.mxu0 0.0
    %1462 = vmatpush1.msra.mxu0 0.0
    %1463 = vmatprep.subr.mxu0 0.0
    %1464 = vmatpush1.msra.mxu0 0.0
    %1465 = vmatprep.subr.mxu0 0.0
    %1466 = vmatpush1.msra.mxu0 0.0
    %1467 = vmatprep.subr.mxu0 0.0
    %1468 = vmatpush1.msra.mxu0 0.0
    %1469 = vmatprep.subr.mxu0 0.0
    %1470 = vmatpush1.msra.mxu0 0.0
    %1471 = vmatprep.subr.mxu0 0.0
    %1472 = vmatpush1.msra.mxu0 0.0
    %1473 = vmatprep.subr.mxu0 0.0
    %1474 = vmatpush1.msra.mxu0 0.0
    %1475 = vmatprep.subr.mxu0 0.0
    %1476 = vmatpush1.msra.mxu0 0.0
    %1477 = vmatprep.subr.mxu0 0.0
    %1478 = vmatpush1.msra.mxu0 0.0
    %1479 = vmatprep.subr.mxu0 0.0
    %1480 = vmatpush1.msra.mxu0 0.0
    %1481 = vmatprep.subr.mxu0 0.0
    %1482 = vmatpush1.msra.mxu0 0.0
    %1483 = vmatprep.subr.mxu0 0.0
    %1484 = vmatpush1.msra.mxu0 0.0
    %1485 = vmatprep.subr.mxu0 0.0
    %1486 = vmatpush1.msra.mxu0 0.0
    %1487 = vmatprep.subr.mxu0 0.0
    %1488 = vmatpush1.msra.mxu0 0.0
    %1489 = vmatprep.subr.mxu0 0.0
    %1490 = vmatpush1.msra.mxu0 0.0
    %1491 = vmatprep.subr.mxu0 0.0
    %1492 = vmatpush1.msra.mxu0 0.0
    %1493 = vmatprep.subr.mxu0 0.0
    %1494 = vmatpush1.msra.mxu0 0.0
    %1495 = vmatprep.subr.mxu0 0.0
    %1496 = vmatpush1.msra.mxu0 0.0
    %1497 = vmatprep.mubr.f32.mxu0 0.0
    %1498 = vmatmul.mubr.f32.gmra.mrb[0].mxu0 %v1431
    %v1499 = vpop.f32.mrb[0].mxu0
    %v1500 = vadd.f32 0.0, %v1499
    %v1501 = vpop.f32.mrb[0].mxu0
    %1502 = vdwg.mxu0
    %v1503 = vadd.f32 %v1421, %v1500
    %s1504 = scalar_lea.vmem [#allocation2], 6
    %v1505 = vld [vmem:[%s1504] ss:$8 sm:$0xf]
    %v1506 = vld [vmem:[%s1504] ss:$8 sm:$0xf0]
    %v1507 = vor.u32 %v1505, %v1506
    %v1508 = vld [vmem:[%s4 + $0xc0] sm:$0xff]
    %v1509 = vld [vmem:[%s4 + $0xc8] sm:$0xff]
    %v1510 = vld [vmem:[%s4 + $0xd0] sm:$0xff]
    %v1511 = vld [vmem:[%s4 + $0xd8] sm:$0xff]
    %v1513 = vsel %vm187, %v1507, 0
    %1515 = vmatprep.subr.mxu0 0.0
    %1516 = vmatpush1.msra.mxu0 %v1508
    %1517 = vmatprep.subr.mxu0 0.0
    %1518 = vmatpush1.msra.mxu0 %v1509
    %1519 = vmatprep.subr.mxu0 0.0
    %1520 = vmatpush1.msra.mxu0 %v1510
    %1521 = vmatprep.subr.mxu0 0.0
    %1522 = vmatpush1.msra.mxu0 %v1511
    %1523 = vmatprep.subr.mxu0 0.0
    %1524 = vmatpush1.msra.mxu0 0.0
    %1525 = vmatprep.subr.mxu0 0.0
    %1526 = vmatpush1.msra.mxu0 0.0
    %1527 = vmatprep.subr.mxu0 0.0
    %1528 = vmatpush1.msra.mxu0 0.0
    %1529 = vmatprep.subr.mxu0 0.0
    %1530 = vmatpush1.msra.mxu0 0.0
    %1531 = vmatprep.subr.mxu0 0.0
    %1532 = vmatpush1.msra.mxu0 0.0
    %1533 = vmatprep.subr.mxu0 0.0
    %1534 = vmatpush1.msra.mxu0 0.0
    %1535 = vmatprep.subr.mxu0 0.0
    %1536 = vmatpush1.msra.mxu0 0.0
    %1537 = vmatprep.subr.mxu0 0.0
    %1538 = vmatpush1.msra.mxu0 0.0
    %1539 = vmatprep.subr.mxu0 0.0
    %1540 = vmatpush1.msra.mxu0 0.0
    %1541 = vmatprep.subr.mxu0 0.0
    %1542 = vmatpush1.msra.mxu0 0.0
    %1543 = vmatprep.subr.mxu0 0.0
    %1544 = vmatpush1.msra.mxu0 0.0
    %1545 = vmatprep.subr.mxu0 0.0
    %1546 = vmatpush1.msra.mxu0 0.0
    %1547 = vmatprep.subr.mxu0 0.0
    %1548 = vmatpush1.msra.mxu0 0.0
    %1549 = vmatprep.subr.mxu0 0.0
    %1550 = vmatpush1.msra.mxu0 0.0
    %1551 = vmatprep.subr.mxu0 0.0
    %1552 = vmatpush1.msra.mxu0 0.0
    %1553 = vmatprep.subr.mxu0 0.0
    %1554 = vmatpush1.msra.mxu0 0.0
    %1555 = vmatprep.subr.mxu0 0.0
    %1556 = vmatpush1.msra.mxu0 0.0
    %1557 = vmatprep.subr.mxu0 0.0
    %1558 = vmatpush1.msra.mxu0 0.0
    %1559 = vmatprep.subr.mxu0 0.0
    %1560 = vmatpush1.msra.mxu0 0.0
    %1561 = vmatprep.subr.mxu0 0.0
    %1562 = vmatpush1.msra.mxu0 0.0
    %1563 = vmatprep.subr.mxu0 0.0
    %1564 = vmatpush1.msra.mxu0 0.0
    %1565 = vmatprep.subr.mxu0 0.0
    %1566 = vmatpush1.msra.mxu0 0.0
    %1567 = vmatprep.subr.mxu0 0.0
    %1568 = vmatpush1.msra.mxu0 0.0
    %1569 = vmatprep.subr.mxu0 0.0
    %1570 = vmatpush1.msra.mxu0 0.0
    %1571 = vmatprep.subr.mxu0 0.0
    %1572 = vmatpush1.msra.mxu0 0.0
    %1573 = vmatprep.subr.mxu0 0.0
    %1574 = vmatpush1.msra.mxu0 0.0
    %1575 = vmatprep.subr.mxu0 0.0
    %1576 = vmatpush1.msra.mxu0 0.0
    %1577 = vmatprep.subr.mxu0 0.0
    %1578 = vmatpush1.msra.mxu0 0.0
    %1579 = vmatprep.mubr.f32.mxu0 0.0
    %1580 = vmatmul.mubr.f32.gmra.mrb[0].mxu0 %v1513
    %v1581 = vpop.f32.mrb[0].mxu0
    %v1582 = vadd.f32 0.0, %v1581
    %v1583 = vpop.f32.mrb[0].mxu0
    %1584 = vdwg.mxu0
    %v1585 = vadd.f32 %v1503, %v1582
    %s1586 = scalar_lea.vmem [#allocation2], 7
    %v1587 = vld [vmem:[%s1586] ss:$8 sm:$0xf]
    %v1588 = vld [vmem:[%s1586] ss:$8 sm:$0xf0]
    %v1589 = vor.u32 %v1587, %v1588
    %v1590 = vld [vmem:[%s4 + $0xe0] sm:$0xff]
    %v1591 = vld [vmem:[%s4 + $0xe8] sm:$0xff]
    %v1592 = vld [vmem:[%s4 + $0xf0] sm:$0xff]
    %v1593 = vld [vmem:[%s4 + $0xf8] sm:$0xff]
    %v1595 = vsel %vm187, %v1589, 0
    %1597 = vmatprep.subr.mxu0 0.0
    %1598 = vmatpush1.msra.mxu0 %v1590
    %1599 = vmatprep.subr.mxu0 0.0
    %1600 = vmatpush1.msra.mxu0 %v1591
    %1601 = vmatprep.subr.mxu0 0.0
    %1602 = vmatpush1.msra.mxu0 %v1592
    %1603 = vmatprep.subr.mxu0 0.0
    %1604 = vmatpush1.msra.mxu0 %v1593
    %1605 = vmatprep.subr.mxu0 0.0
    %1606 = vmatpush1.msra.mxu0 0.0
    %1607 = vmatprep.subr.mxu0 0.0
    %1608 = vmatpush1.msra.mxu0 0.0
    %1609 = vmatprep.subr.mxu0 0.0
    %1610 = vmatpush1.msra.mxu0 0.0
    %1611 = vmatprep.subr.mxu0 0.0
    %1612 = vmatpush1.msra.mxu0 0.0
    %1613 = vmatprep.subr.mxu0 0.0
    %1614 = vmatpush1.msra.mxu0 0.0
    %1615 = vmatprep.subr.mxu0 0.0
    %1616 = vmatpush1.msra.mxu0 0.0
    %1617 = vmatprep.subr.mxu0 0.0
    %1618 = vmatpush1.msra.mxu0 0.0
    %1619 = vmatprep.subr.mxu0 0.0
    %1620 = vmatpush1.msra.mxu0 0.0
    %1621 = vmatprep.subr.mxu0 0.0
    %1622 = vmatpush1.msra.mxu0 0.0
    %1623 = vmatprep.subr.mxu0 0.0
    %1624 = vmatpush1.msra.mxu0 0.0
    %1625 = vmatprep.subr.mxu0 0.0
    %1626 = vmatpush1.msra.mxu0 0.0
    %1627 = vmatprep.subr.mxu0 0.0
    %1628 = vmatpush1.msra.mxu0 0.0
    %1629 = vmatprep.subr.mxu0 0.0
    %1630 = vmatpush1.msra.mxu0 0.0
    %1631 = vmatprep.subr.mxu0 0.0
    %1632 = vmatpush1.msra.mxu0 0.0
    %1633 = vmatprep.subr.mxu0 0.0
    %1634 = vmatpush1.msra.mxu0 0.0
    %1635 = vmatprep.subr.mxu0 0.0
    %1636 = vmatpush1.msra.mxu0 0.0
    %1637 = vmatprep.subr.mxu0 0.0
    %1638 = vmatpush1.msra.mxu0 0.0
    %1639 = vmatprep.subr.mxu0 0.0
    %1640 = vmatpush1.msra.mxu0 0.0
    %1641 = vmatprep.subr.mxu0 0.0
    %1642 = vmatpush1.msra.mxu0 0.0
    %1643 = vmatprep.subr.mxu0 0.0
    %1644 = vmatpush1.msra.mxu0 0.0
    %1645 = vmatprep.subr.mxu0 0.0
    %1646 = vmatpush1.msra.mxu0 0.0
    %1647 = vmatprep.subr.mxu0 0.0
    %1648 = vmatpush1.msra.mxu0 0.0
    %1649 = vmatprep.subr.mxu0 0.0
    %1650 = vmatpush1.msra.mxu0 0.0
    %1651 = vmatprep.subr.mxu0 0.0
    %1652 = vmatpush1.msra.mxu0 0.0
    %1653 = vmatprep.subr.mxu0 0.0
    %1654 = vmatpush1.msra.mxu0 0.0
    %1655 = vmatprep.subr.mxu0 0.0
    %1656 = vmatpush1.msra.mxu0 0.0
    %1657 = vmatprep.subr.mxu0 0.0
    %1658 = vmatpush1.msra.mxu0 0.0
    %1659 = vmatprep.subr.mxu0 0.0
    %1660 = vmatpush1.msra.mxu0 0.0
    %1661 = vmatprep.mubr.f32.mxu0 0.0
    %1662 = vmatmul.mubr.f32.gmra.mrb[0].mxu0 %v1595
    %v1663 = vpop.f32.mrb[0].mxu0
    %v1664 = vadd.f32 0.0, %v1663
    %v1665 = vpop.f32.mrb[0].mxu0
    %1666 = vdwg.mxu0
    %v1667 = vadd.f32 %v1585, %v1664
    %v1668 = vld [vmem:[%s5] sm:$0x1]
    %v1670 = vlaneseq
    %v1671 = vshrl.u32 %v1670, 7
    %v1672 = vsub.s32 0, %v1671
    %v1673 = vrot.slane %v1668, %v1672
    %v1675 = vadd.f32 %v1667, %v1673
    %1676 = vst.msk [vmem:[%s8] sm:$0xff] %vm187, %v1675
    // Predicated region
    $region34: #{generator_forward.1} parent=1 // pred_check
      _
    $region35: #{generator_forward.1} parent=1 // pred_check_branch
      %1678 = sbr.rel (0) target = $region37
    $region36: #{generator_forward.1} parent=1 // pred_region
      _
    $region37: #{generator_forward.1} parent=1 // pred_fallthru
      _
    // Predicated region
    $region38: #{generator_forward.1} parent=1 // pred_check
      _
    $region39: #{generator_forward.1} parent=1 // pred_check_branch
      %1680 = sbr.rel (0) target = $region41
    $region40: #{generator_forward.1} parent=1 // pred_region
      %s1682 = ssub.s32 128, 128
      %1683 = vsyncadd [#allocation4], %s1682
      %s1685 = sshll.u32 [#allocation3], 4
      %s1686 = int_to_ptr.vmem [resolvable:$true] %s1685
      %1688 = dma.vmem_to_hbm [thread:$0]  %s1686, 128, %s9, [#allocation4]
    $region41: #{generator_forward.1} parent=1 // pred_fallthru
      _
    // Predicated region
    $region42: #{generator_forward.1} parent=1 // pred_check
      _
    $region43: #{generator_forward.1} parent=1 // pred_check_branch
      %1690 = sbr.rel (0) target = $region45
    $region44: #{generator_forward.1} parent=1 // pred_region
      %s1692 = ssub.s32 128, 128
      %1693 = vsyncadd [#allocation6], %s1692
      %s1695 = sshll.u32 [#allocation5], 4
      %s1696 = int_to_ptr.vmem [resolvable:$true] %s1695
      %1698 = dma.vmem_to_hbm [thread:$0]  %s1696, 128, %s10, [#allocation6]
    $region45: #{generator_forward.1} parent=1 // pred_fallthru
      _
    // Predicated region
    $region46: #{generator_forward.1} parent=1 // pred_check
      _
    $region47: #{generator_forward.1} parent=1 // pred_check_branch
      %1700 = sbr.rel (0) target = $region49
    $region48: #{generator_forward.1} parent=1 // pred_region
      _
    $region49: #{generator_forward.1} parent=1 // pred_fallthru
      _
    // Predicated region
    $region50: #{generator_forward.1} parent=1 // pred_check
      _
    $region51: #{generator_forward.1} parent=1 // pred_check_branch
      %1702 = sbr.rel (0) target = $region53
    $region52: #{generator_forward.1} parent=1 // pred_region
      %1703 = dma.done [#allocation4], 128
    $region53: #{generator_forward.1} parent=1 // pred_fallthru
      _
    // Predicated region
    $region54: #{generator_forward.1} parent=1 // pred_check
      _
    $region55: #{generator_forward.1} parent=1 // pred_check_branch
      %1705 = sbr.rel (0) target = $region57
    $region56: #{generator_forward.1} parent=1 // pred_region
      %1706 = dma.done [#allocation6], 128
    $region57: #{generator_forward.1} parent=1 // pred_fallthru
      _
    %1707 = vsyncpa [#allocation4], 1
    %1708 = vsyncpa [#allocation6], 1

</llo_original>
